<compile_context>
chip_gen: v7x
topology: tpu7x:2x2x1
jax: 0.10.0
libtpu: 0.0.40
codegen_flags: <defaults>
</compile_context>

<pallas_src>
import functools

import jax
import jax.numpy as jnp
from jax import lax
from jax.experimental import pallas as pl
from jax.experimental.pallas import tpu as pltpu

EXPANSION = 4
BN_EPS = 1e-5


def _round_up(x, m):
    return (x + m - 1) // m * m


# ----------------------------------------------------------------------------
# Parameter init (matches the PyTorch module; BN in eval/running-stats form)
# ----------------------------------------------------------------------------
def _init_bn(key, c):
    k1, k2, k3, k4 = jax.random.split(key, 4)
    gamma = 1.0 + 0.1 * jax.random.normal(k1, (c,), jnp.float32)
    beta = 0.1 * jax.random.normal(k2, (c,), jnp.float32)
    mean = 0.1 * jax.random.normal(k3, (c,), jnp.float32)
    var = 0.5 + jax.random.uniform(k4, (c,), jnp.float32)
    return (gamma, beta, mean, var)


def init_bottleneck_params(key, in_planes, planes, stride):
    out_planes = EXPANSION * planes
    keys = jax.random.split(key, 8)
    params = {
        "conv1_w": 0.2 * jax.random.normal(keys[0], (planes, in_planes, 1, 1), jnp.float32),
        "bn1": _init_bn(keys[1], planes),
        "conv2_w": 0.1 * jax.random.normal(keys[2], (planes, planes, 3, 3), jnp.float32),
        "bn2": _init_bn(keys[3], planes),
        "conv3_w": 0.2 * jax.random.normal(keys[4], (out_planes, planes, 1, 1), jnp.float32),
        "bn3": _init_bn(keys[5], out_planes),
    }
    if stride != 1 or in_planes != out_planes:
        params["sc_conv_w"] = 0.2 * jax.random.normal(
            keys[6], (out_planes, in_planes, 1, 1), jnp.float32)
        params["bn_sc"] = _init_bn(keys[7], out_planes)
    return params


def _bn_fold(bn):
    gamma, beta, mean, var = bn
    scale = gamma * lax.rsqrt(var + BN_EPS)
    shift = beta - mean * scale
    return scale, shift


def fold_params(params):
    """One-time prep (off the hot path): fold eval-mode BN scale into the conv
    weights, transpose to matmul layout, reshape the 3x3 weight for the single
    im2col matmul, cast weights to bf16 for the MXU.  Only the per-channel
    shift remains as an in-kernel f32 bias add."""
    s1, b1 = _bn_fold(params["bn1"])
    s2, b2 = _bn_fold(params["bn2"])
    s3, b3 = _bn_fold(params["bn3"])

    w1 = params["conv1_w"][:, :, 0, 0].T * s1[None, :]            # (Cin, P)
    w2 = jnp.transpose(params["conv2_w"], (2, 3, 1, 0))            # (3, 3, I, O)
    planes = w2.shape[-1]
    w2 = (w2 * s2[None, None, None, :]).reshape(9 * planes, planes)  # (9P, P)
    w3 = params["conv3_w"][:, :, 0, 0].T * s3[None, :]            # (P, 4P)

    folded = {
        "w1": w1.astype(jnp.bfloat16), "b1": b1.reshape(1, -1),
        "w2": w2.astype(jnp.bfloat16), "b2": b2.reshape(1, -1),
        "w3": w3.astype(jnp.bfloat16), "b3": b3.reshape(1, -1),
    }
    if "sc_conv_w" in params:
        ssc, bsc = _bn_fold(params["bn_sc"])
        wsc = params["sc_conv_w"][:, :, 0, 0].T * ssc[None, :]     # (Cin, 4P)
        folded["wsc"] = wsc.astype(jnp.bfloat16)
        folded["bsc"] = bsc.reshape(1, -1)
    return folded


# ----------------------------------------------------------------------------
# Fused bottleneck kernel (one grid step == B_blk images)
# ----------------------------------------------------------------------------
def _make_bottleneck_kernel(B, H, W, Ho, Wo, stride, cin, planes, cout,
                            has_proj, need_xs, Wp_pad):
    Hp = H + 2

    def kernel(*refs):
        i = 0
        x_ref = refs[i]; i += 1                       # (B, H, W, Cin)      bf16
        if need_xs:
            xs_ref = refs[i]; i += 1                  # (B, Ho, Wo, Cin)    bf16
        w1_ref, b1_ref, w2_ref, b2_ref, w3_ref, b3_ref = refs[i:i + 6]
        i += 6
        if has_proj:
            wsc_ref, bsc_ref = refs[i:i + 2]; i += 2
        o_ref = refs[i]; i += 1                       # (B, Ho, Wo, Cout)   bf16
        c1p_ref = refs[i]                             # (B, Hp, Wp_pad, P)  f32 scratch

        x = x_ref[...]                                # bf16
        x2d = x.reshape(B * H * W, cin)

        # ---- conv1 (1x1) + bn1 + relu (BN scale pre-folded into w1) --------
        c1 = jnp.dot(x2d, w1_ref[...], preferred_element_type=jnp.float32)
        c1 = jnp.maximum(c1 + b1_ref[...], 0.0)

        # ---- stage conv1 output in a padded VMEM scratch --------------------
        # Only the 1-wide halo is cleared each step (core-safe, far cheaper
        # than zeroing the whole slab); the interior is fully overwritten and
        # the sublane-alignment pad columns are never read by any tap.
        zero_row = jnp.zeros((B, 1, Wp_pad, planes), jnp.float32)
        c1p_ref[:, 0:1, :, :] = zero_row
        c1p_ref[:, Hp - 1:Hp, :, :] = zero_row
        zero_col = jnp.zeros((B, Hp, 1, planes), jnp.float32)
        c1p_ref[:, :, 0:1, :] = zero_col
        c1p_ref[:, :, W + 1:W + 2, :] = zero_col
        c1p_ref[:, 1:H + 1, 1:W + 1, :] = c1.reshape(B, H, W, planes)

        # ---- conv2 (3x3, stride, pad=1) as ONE im2col MXU matmul -------------
        taps = []
        for kh in range(3):
            for kw in range(3):
                if stride == 1:
                    patch = c1p_ref[:, kh:kh + Ho, kw:kw + Wo, :]
                else:
                    patch = c1p_ref[:, pl.ds(kh, Ho, stride=stride),
                                    pl.ds(kw, Wo, stride=stride), :]
                taps.append(patch.reshape(B * Ho * Wo, planes).astype(jnp.bfloat16))
        im2col = jnp.concatenate(taps, axis=-1)        # (B*Ho*Wo, 9P) bf16
        c2 = jnp.dot(im2col, w2_ref[...], preferred_element_type=jnp.float32)
        c2 = jnp.maximum(c2 + b2_ref[...], 0.0).astype(jnp.bfloat16)

        # ---- conv3 (1x1) + bn3 ------------------------------------------------
        c3 = jnp.dot(c2, w3_ref[...], preferred_element_type=jnp.float32)
        c3 = c3 + b3_ref[...]

        # ---- shortcut (projection conv+bn, or identity) -----------------------
        if has_proj:
            xs = xs_ref[...].reshape(B * Ho * Wo, cin) if need_xs else x2d
            sc = jnp.dot(xs, wsc_ref[...], preferred_element_type=jnp.float32)
            sc = sc + bsc_ref[...]
        else:
            sc = x2d.astype(jnp.float32)

        # ---- residual add + relu, single bf16 store ---------------------------
        out = jnp.maximum(c3 + sc, 0.0)
        o_ref[...] = out.astype(jnp.bfloat16).reshape(B, Ho, Wo, cout)

    return kernel


# ----------------------------------------------------------------------------
# VMEM budgeting helpers
# ----------------------------------------------------------------------------
def _vmem_capacity_bytes():
    try:
        return int(pltpu.get_tpu_info().vmem_capacity_bytes)
    except Exception:
        return 64 * 1024 * 1024   # v7x per-TensorCore worst case


def _step_vmem_bytes(B, H, W, Ho, Wo, cin, planes, cout, need_xs, weight_bytes):
    Hp, Wp = H + 2, _round_up(W + 2, 8)
    b = 2 * B * H * W * cin * 2                 # x block (double-buffered, bf16)
    b += 2 * B * Ho * Wo * cout * 2             # out block (double-buffered, bf16)
    if need_xs:
        b += 2 * B * Ho * Wo * cin * 2          # shortcut input (bf16)
    b += B * Hp * Wp * planes * 4               # padded conv1 scratch (f32)
    b += B * Ho * Wo * 9 * planes * 2           # im2col operand (bf16)
    b += B * H * W * planes * 4                 # conv1 f32 result
    b += B * Ho * Wo * (planes + 2 * cout) * 4  # conv2 / conv3 / shortcut f32
    return b + weight_bytes                     # weights single-buffered


def _pick_batch_block(N, HoWo, budget_bytes, step_bytes_fn, target_rows=256):
    best = 1
    for b in range(1, N + 1):
        if N % b:
            continue
        if step_bytes_fn(b) > budget_bytes:
            break
        best = b
        if b * HoWo >= target_rows:
            break
    return best


# ----------------------------------------------------------------------------
# Forward wrapper (NHWC / bf16 end-to-end; no layout transposes on hot path)
# ----------------------------------------------------------------------------
@functools.partial(jax.jit, static_argnames=("stride",))
def bottleneck_forward_nhwc(x, folded, stride):
    """x: (N, H, W, Cin) NHWC (any float dtype, computed in bf16).
    Returns (N, Ho, Wo, 4*planes) NHWC bf16."""
    x = x.astype(jnp.bfloat16)
    N, H, W, cin = x.shape
    planes = folded["w1"].shape[1]
    cout = folded["w3"].shape[1]
    Ho = (H + 2 - 3) // stride + 1
    Wo = (W + 2 - 3) // stride + 1
    has_proj = "wsc" in folded
    need_xs = has_proj and stride > 1

    weight_names = ["w1", "b1", "w2", "b2", "w3", "b3"]
    if has_proj:
        weight_names += ["wsc", "bsc"]
    weight_bytes = sum(int(folded[k].size) * folded[k].dtype.itemsize
                       for k in weight_names)

    cap = _vmem_capacity_bytes()
    step_fn = lambda b: _step_vmem_bytes(b, H, W, Ho, Wo, cin, planes, cout,
                                         need_xs, weight_bytes)
    B_blk = _pick_batch_block(N, Ho * Wo, budget_bytes=cap // 2,
                              step_bytes_fn=step_fn)
    vmem_limit = int(min(max(step_fn(B_blk) * 3 // 2, 32 * 1024 * 1024),
                         cap * 9 // 10))

    Wp_pad = _round_up(W + 2, 8)

    def const_spec(arr):
        nd = arr.ndim
        # Constant block index -> weights stay resident; single-buffer them so
        # the pipeline does not waste a second VMEM copy (v7x: 64 MiB/TC).
        return pl.BlockSpec(arr.shape, lambda n, _nd=nd: (0,) * _nd,
                            pipeline_mode=pl.Buffered(1))

    args = [x]
    in_specs = [pl.BlockSpec((B_blk, H, W, cin), lambda n: (n, 0, 0, 0))]
    if need_xs:
        # TODO(synk): gather the strided shortcut input in-kernel instead of
        # materializing this (small, bf16) stream in XLA.
        xs = x[:, ::stride, ::stride, :]
        args.append(xs)
        in_specs.append(pl.BlockSpec((B_blk, Ho, Wo, cin), lambda n: (n, 0, 0, 0)))
    for name in weight_names:
        args.append(folded[name])
        in_specs.append(const_spec(folded[name]))

    kernel = _make_bottleneck_kernel(B_blk, H, W, Ho, Wo, stride, cin, planes,
                                     cout, has_proj, need_xs, Wp_pad)

    out = pl.pallas_call(
        kernel,
        out_shape=jax.ShapeDtypeStruct((N, Ho, Wo, cout), jnp.bfloat16),
        grid_spec=pltpu.PrefetchScalarGridSpec(
            num_scalar_prefetch=0,
            grid=(N // B_blk,),
            in_specs=in_specs,
            out_specs=pl.BlockSpec((B_blk, Ho, Wo, cout), lambda n: (n, 0, 0, 0)),
            scratch_shapes=[pltpu.VMEM((B_blk, H + 2, Wp_pad, planes), jnp.float32)],
        ),
        compiler_params=pltpu.CompilerParams(
            dimension_semantics=("parallel",),
            vmem_limit_bytes=vmem_limit),
    )(*args)
    return out


# ----------------------------------------------------------------------------
# Pure-JAX reference (lax.conv, NCHW like the PyTorch module) for correctness
# ----------------------------------------------------------------------------
def _conv_ref(x, w, stride, pad):
    return lax.conv_general_dilated(
        x, w, (stride, stride), [(pad, pad), (pad, pad)],
        dimension_numbers=("NCHW", "OIHW", "NCHW"))


def _bn_ref(x, bn):
    gamma, beta, mean, var = bn
    sh = (1, -1, 1, 1)
    return (x - mean.reshape(sh)) * lax.rsqrt(var.reshape(sh) + BN_EPS) \
        * gamma.reshape(sh) + beta.reshape(sh)


def bottleneck_reference(x, params, stride):
    out = jax.nn.relu(_bn_ref(_conv_ref(x, params["conv1_w"], 1, 0), params["bn1"]))
    out = jax.nn.relu(_bn_ref(_conv_ref(out, params["conv2_w"], stride, 1), params["bn2"]))
    out = _bn_ref(_conv_ref(out, params["conv3_w"], 1, 0), params["bn3"])
    if "sc_conv_w" in params:
        sc = _bn_ref(_conv_ref(x, params["sc_conv_w"], stride, 0), params["bn_sc"])
    else:
        sc = x
    return jax.nn.relu(out + sc)


# ----------------------------------------------------------------------------
if __name__ == "__main__":
    key = jax.random.PRNGKey(0)
    k_x1, k_p1, k_x2, k_p2 = jax.random.split(key, 4)
    TOL = 4e-2   # bf16 activations/weights with f32 accumulation

    # Case 1: projection shortcut (stride=2, channels 4 -> 16).
    batch, in_planes, planes, spatial, stride = 2, 4, 4, 16, 2
    x1 = jax.random.normal(k_x1, (batch, in_planes, spatial, spatial), jnp.float32)  # NCHW (spec)
    p1 = init_bottleneck_params(k_p1, in_planes, planes, stride)
    f1 = fold_params(p1)
    # Harness-side one-time layout/dtype prep (kernel path is NHWC/bf16 end-to-end).
    x1_nhwc = jnp.transpose(x1, (0, 2, 3, 1)).astype(jnp.bfloat16)
    out1 = jax.block_until_ready(bottleneck_forward_nhwc(x1_nhwc, f1, stride=stride))
    ref1 = jnp.transpose(bottleneck_reference(x1, p1, stride), (0, 2, 3, 1))
    assert out1.shape == ref1.shape == (batch, spatial // stride, spatial // stride,
                                        EXPANSION * planes)
    out1_f = out1.astype(jnp.float32)
    assert jnp.allclose(out1_f, ref1, atol=TOL, rtol=TOL), (
        f"projection case: max abs diff {jnp.max(jnp.abs(out1_f - ref1))}")

    # Case 2: identity shortcut (stride=1, in_planes == expansion*planes).
    in_planes2, planes2, stride2 = 16, 4, 1
    x2 = jax.random.normal(k_x2, (batch, in_planes2, spatial, spatial), jnp.float32)
    p2 = init_bottleneck_params(k_p2, in_planes2, planes2, stride2)
    f2 = fold_params(p2)
    x2_nhwc = jnp.transpose(x2, (0, 2, 3, 1)).astype(jnp.bfloat16)
    out2 = jax.block_until_ready(bottleneck_forward_nhwc(x2_nhwc, f2, stride=stride2))
    ref2 = jnp.transpose(bottleneck_reference(x2, p2, stride2), (0, 2, 3, 1))
    assert out2.shape == ref2.shape == (batch, spatial, spatial, EXPANSION * planes2)
    out2_f = out2.astype(jnp.float32)
    assert jnp.allclose(out2_f, ref2, atol=TOL, rtol=TOL), (
        f"identity case: max abs diff {jnp.max(jnp.abs(out2_f - ref2))}")

    print("KERNEL_OK")
</pallas_src>

<mosaic_0001>
module attributes {stable_mosaic.version = 11 : i64} {
  func.func @kernel(%arg0: i32, %arg1: memref<2x16x16x4xbf16, #tpu.memory_space<vmem>>, %arg2: memref<2x8x8x4xbf16, #tpu.memory_space<vmem>>, %arg3: memref<4x4xbf16, #tpu.memory_space<vmem>>, %arg4: memref<1x4xf32, #tpu.memory_space<vmem>>, %arg5: memref<36x4xbf16, #tpu.memory_space<vmem>>, %arg6: memref<1x4xf32, #tpu.memory_space<vmem>>, %arg7: memref<4x16xbf16, #tpu.memory_space<vmem>>, %arg8: memref<1x16xf32, #tpu.memory_space<vmem>>, %arg9: memref<4x16xbf16, #tpu.memory_space<vmem>>, %arg10: memref<1x16xf32, #tpu.memory_space<vmem>>, %arg11: memref<2x8x8x16xbf16, #tpu.memory_space<vmem>>, %arg12: memref<2x18x24x4xf32, #tpu.memory_space<vmem>>) attributes {dimension_semantics = [#tpu.dimension_semantics<parallel>], iteration_bounds = array<i64: 1>, scalar_prefetch = 0 : i64, scratch_operands = 1 : i64, tpu.core_type = #tpu.core_type<tc>, window_params = [{transform_indices = @transform_0, window_bounds = array<i64: 2, 16, 16, 4>}, {transform_indices = @transform_1, window_bounds = array<i64: 2, 8, 8, 4>}, {pipeline_mode = #tpu.pipeline_mode<synchronous>, transform_indices = @transform_2, window_bounds = array<i64: 4, 4>}, {pipeline_mode = #tpu.pipeline_mode<synchronous>, transform_indices = @transform_3, window_bounds = array<i64: 1, 4>}, {pipeline_mode = #tpu.pipeline_mode<synchronous>, transform_indices = @transform_4, window_bounds = array<i64: 36, 4>}, {pipeline_mode = #tpu.pipeline_mode<synchronous>, transform_indices = @transform_5, window_bounds = array<i64: 1, 4>}, {pipeline_mode = #tpu.pipeline_mode<synchronous>, transform_indices = @transform_6, window_bounds = array<i64: 4, 16>}, {pipeline_mode = #tpu.pipeline_mode<synchronous>, transform_indices = @transform_7, window_bounds = array<i64: 1, 16>}, {pipeline_mode = #tpu.pipeline_mode<synchronous>, transform_indices = @transform_8, window_bounds = array<i64: 4, 16>}, {pipeline_mode = #tpu.pipeline_mode<synchronous>, transform_indices = @transform_9, window_bounds = array<i64: 1, 16>}, {transform_indices = @transform_10, window_bounds = array<i64: 2, 8, 8, 16>}]} {
    %c0 = arith.constant 0 : index
    %c0_0 = arith.constant 0 : index
    %c0_1 = arith.constant 0 : index
    %c0_2 = arith.constant 0 : index
    %0 = vector.load %arg1[%c0, %c0_0, %c0_1, %c0_2] : memref<2x16x16x4xbf16, #tpu.memory_space<vmem>>, vector<2x16x16x4xbf16>
    %1 = vector.shape_cast %0 : vector<2x16x16x4xbf16> to vector<512x4xbf16>
    %c0_3 = arith.constant 0 : index
    %c0_4 = arith.constant 0 : index
    %2 = vector.load %arg3[%c0_3, %c0_4] : memref<4x4xbf16, #tpu.memory_space<vmem>>, vector<4x4xbf16>
    %cst = arith.constant dense<0.000000e+00> : vector<512x4xf32>
    %3 = tpu.matmul %1, %2, %cst {dimension_numbers = #tpu.dot_dimension_numbers<[1], [0], [0], [1], [0, 0, 1, 1], [], []>} : vector<512x4xbf16>, vector<4x4xbf16>, vector<512x4xf32> -> vector<512x4xf32>
    %c0_5 = arith.constant 0 : index
    %c0_6 = arith.constant 0 : index
    %4 = vector.load %arg4[%c0_5, %c0_6] : memref<1x4xf32, #tpu.memory_space<vmem>>, vector<1x4xf32>
    %5 = vector.broadcast %4 : vector<1x4xf32> to vector<512x4xf32>
    %6 = arith.addf %3, %5 : vector<512x4xf32>
    %cst_7 = arith.constant 0.000000e+00 : f32
    %7 = vector.broadcast %cst_7 : f32 to vector<512x4xf32>
    %8 = arith.maximumf %6, %7 : vector<512x4xf32>
    %cst_8 = arith.constant 0.000000e+00 : f32
    %9 = vector.broadcast %cst_8 : f32 to vector<2x1x24x4xf32>
    %c0_9 = arith.constant 0 : index
    %c0_10 = arith.constant 0 : index
    %c0_11 = arith.constant 0 : index
    %c0_12 = arith.constant 0 : index
    %10 = vector.load %arg12[%c0_9, %c0_10, %c0_11, %c0_12] : memref<2x18x24x4xf32, #tpu.memory_space<vmem>>, vector<2x1x24x4xf32>
    tpu.vector_store %arg12[%c0_9, %c0_10, %c0_11, %c0_12], %9 {strides = array<i32>} : memref<2x18x24x4xf32, #tpu.memory_space<vmem>>, vector<2x1x24x4xf32>,
    %c0_13 = arith.constant 0 : index
    %c17 = arith.constant 17 : index
    %c0_14 = arith.constant 0 : index
    %c0_15 = arith.constant 0 : index
    %11 = vector.load %arg12[%c0_13, %c17, %c0_14, %c0_15] : memref<2x18x24x4xf32, #tpu.memory_space<vmem>>, vector<2x1x24x4xf32>
    tpu.vector_store %arg12[%c0_13, %c17, %c0_14, %c0_15], %9 {strides = array<i32>} : memref<2x18x24x4xf32, #tpu.memory_space<vmem>>, vector<2x1x24x4xf32>,
    %cst_16 = arith.constant 0.000000e+00 : f32
    %12 = vector.broadcast %cst_16 : f32 to vector<2x18x1x4xf32>
    %c0_17 = arith.constant 0 : index
    %c0_18 = arith.constant 0 : index
    %c0_19 = arith.constant 0 : index
    %c0_20 = arith.constant 0 : index
    %13 = vector.load %arg12[%c0_17, %c0_18, %c0_19, %c0_20] : memref<2x18x24x4xf32, #tpu.memory_space<vmem>>, vector<2x18x1x4xf32>
    tpu.vector_store %arg12[%c0_17, %c0_18, %c0_19, %c0_20], %12 {strides = array<i32>} : memref<2x18x24x4xf32, #tpu.memory_space<vmem>>, vector<2x18x1x4xf32>,
    %c0_21 = arith.constant 0 : index
    %c0_22 = arith.constant 0 : index
    %c17_23 = arith.constant 17 : index
    %c0_24 = arith.constant 0 : index
    %14 = vector.load %arg12[%c0_21, %c0_22, %c17_23, %c0_24] : memref<2x18x24x4xf32, #tpu.memory_space<vmem>>, vector<2x18x1x4xf32>
    tpu.vector_store %arg12[%c0_21, %c0_22, %c17_23, %c0_24], %12 {strides = array<i32>} : memref<2x18x24x4xf32, #tpu.memory_space<vmem>>, vector<2x18x1x4xf32>,
    %15 = vector.shape_cast %8 : vector<512x4xf32> to vector<2x16x16x4xf32>
    %c0_25 = arith.constant 0 : index
    %c1 = arith.constant 1 : index
    %c1_26 = arith.constant 1 : index
    %c0_27 = arith.constant 0 : index
    %16 = vector.load %arg12[%c0_25, %c1, %c1_26, %c0_27] : memref<2x18x24x4xf32, #tpu.memory_space<vmem>>, vector<2x16x16x4xf32>
    tpu.vector_store %arg12[%c0_25, %c1, %c1_26, %c0_27], %15 {strides = array<i32>} : memref<2x18x24x4xf32, #tpu.memory_space<vmem>>, vector<2x16x16x4xf32>,
    %c0_28 = arith.constant 0 : index
    %c0_29 = arith.constant 0 : index
    %c0_30 = arith.constant 0 : index
    %c0_31 = arith.constant 0 : index
    %17 = tpu.strided_load %arg12[%c0_28, %c0_29, %c0_30, %c0_31] {strides = array<i32: 1, 2, 2, 1>} : memref<2x18x24x4xf32, #tpu.memory_space<vmem>>, vector<2x8x8x4xf32>
    %18 = vector.shape_cast %17 : vector<2x8x8x4xf32> to vector<128x4xf32>
    %19 = arith.truncf %18 : vector<128x4xf32> to vector<128x4xbf16>
    %c0_32 = arith.constant 0 : index
    %c0_33 = arith.constant 0 : index
    %c1_34 = arith.constant 1 : index
    %c0_35 = arith.constant 0 : index
    %20 = tpu.strided_load %arg12[%c0_32, %c0_33, %c1_34, %c0_35] {strides = array<i32: 1, 2, 2, 1>} : memref<2x18x24x4xf32, #tpu.memory_space<vmem>>, vector<2x8x8x4xf32>
    %21 = vector.shape_cast %20 : vector<2x8x8x4xf32> to vector<128x4xf32>
    %22 = arith.truncf %21 : vector<128x4xf32> to vector<128x4xbf16>
    %c0_36 = arith.constant 0 : index
    %c0_37 = arith.constant 0 : index
    %c2 = arith.constant 2 : index
    %c0_38 = arith.constant 0 : index
    %23 = tpu.strided_load %arg12[%c0_36, %c0_37, %c2, %c0_38] {strides = array<i32: 1, 2, 2, 1>} : memref<2x18x24x4xf32, #tpu.memory_space<vmem>>, vector<2x8x8x4xf32>
    %24 = vector.shape_cast %23 : vector<2x8x8x4xf32> to vector<128x4xf32>
    %25 = arith.truncf %24 : vector<128x4xf32> to vector<128x4xbf16>
    %c0_39 = arith.constant 0 : index
    %c1_40 = arith.constant 1 : index
    %c0_41 = arith.constant 0 : index
    %c0_42 = arith.constant 0 : index
    %26 = tpu.strided_load %arg12[%c0_39, %c1_40, %c0_41, %c0_42] {strides = array<i32: 1, 2, 2, 1>} : memref<2x18x24x4xf32, #tpu.memory_space<vmem>>, vector<2x8x8x4xf32>
    %27 = vector.shape_cast %26 : vector<2x8x8x4xf32> to vector<128x4xf32>
    %28 = arith.truncf %27 : vector<128x4xf32> to vector<128x4xbf16>
    %c0_43 = arith.constant 0 : index
    %c1_44 = arith.constant 1 : index
    %c1_45 = arith.constant 1 : index
    %c0_46 = arith.constant 0 : index
    %29 = tpu.strided_load %arg12[%c0_43, %c1_44, %c1_45, %c0_46] {strides = array<i32: 1, 2, 2, 1>} : memref<2x18x24x4xf32, #tpu.memory_space<vmem>>, vector<2x8x8x4xf32>
    %30 = vector.shape_cast %29 : vector<2x8x8x4xf32> to vector<128x4xf32>
    %31 = arith.truncf %30 : vector<128x4xf32> to vector<128x4xbf16>
    %c0_47 = arith.constant 0 : index
    %c1_48 = arith.constant 1 : index
    %c2_49 = arith.constant 2 : index
    %c0_50 = arith.constant 0 : index
    %32 = tpu.strided_load %arg12[%c0_47, %c1_48, %c2_49, %c0_50] {strides = array<i32: 1, 2, 2, 1>} : memref<2x18x24x4xf32, #tpu.memory_space<vmem>>, vector<2x8x8x4xf32>
    %33 = vector.shape_cast %32 : vector<2x8x8x4xf32> to vector<128x4xf32>
    %34 = arith.truncf %33 : vector<128x4xf32> to vector<128x4xbf16>
    %c0_51 = arith.constant 0 : index
    %c2_52 = arith.constant 2 : index
    %c0_53 = arith.constant 0 : index
    %c0_54 = arith.constant 0 : index
    %35 = tpu.strided_load %arg12[%c0_51, %c2_52, %c0_53, %c0_54] {strides = array<i32: 1, 2, 2, 1>} : memref<2x18x24x4xf32, #tpu.memory_space<vmem>>, vector<2x8x8x4xf32>
    %36 = vector.shape_cast %35 : vector<2x8x8x4xf32> to vector<128x4xf32>
    %37 = arith.truncf %36 : vector<128x4xf32> to vector<128x4xbf16>
    %c0_55 = arith.constant 0 : index
    %c2_56 = arith.constant 2 : index
    %c1_57 = arith.constant 1 : index
    %c0_58 = arith.constant 0 : index
    %38 = tpu.strided_load %arg12[%c0_55, %c2_56, %c1_57, %c0_58] {strides = array<i32: 1, 2, 2, 1>} : memref<2x18x24x4xf32, #tpu.memory_space<vmem>>, vector<2x8x8x4xf32>
    %39 = vector.shape_cast %38 : vector<2x8x8x4xf32> to vector<128x4xf32>
    %40 = arith.truncf %39 : vector<128x4xf32> to vector<128x4xbf16>
    %c0_59 = arith.constant 0 : index
    %c2_60 = arith.constant 2 : index
    %c2_61 = arith.constant 2 : index
    %c0_62 = arith.constant 0 : index
    %41 = tpu.strided_load %arg12[%c0_59, %c2_60, %c2_61, %c0_62] {strides = array<i32: 1, 2, 2, 1>} : memref<2x18x24x4xf32, #tpu.memory_space<vmem>>, vector<2x8x8x4xf32>
    %42 = vector.shape_cast %41 : vector<2x8x8x4xf32> to vector<128x4xf32>
    %43 = arith.truncf %42 : vector<128x4xf32> to vector<128x4xbf16>
    %44 = tpu.concatenate %19, %22, %25, %28, %31, %34, %37, %40, %43 in 1 : vector<128x4xbf16>, vector<128x4xbf16>, vector<128x4xbf16>, vector<128x4xbf16>, vector<128x4xbf16>, vector<128x4xbf16>, vector<128x4xbf16>, vector<128x4xbf16>, vector<128x4xbf16> -> vector<128x36xbf16>
    %c0_63 = arith.constant 0 : index
    %c0_64 = arith.constant 0 : index
    %45 = vector.load %arg5[%c0_63, %c0_64] : memref<36x4xbf16, #tpu.memory_space<vmem>>, vector<36x4xbf16>
    %cst_65 = arith.constant dense<0.000000e+00> : vector<128x4xf32>
    %46 = tpu.matmul %44, %45, %cst_65 {dimension_numbers = #tpu.dot_dimension_numbers<[1], [0], [0], [1], [0, 0, 1, 1], [], []>} : vector<128x36xbf16>, vector<36x4xbf16>, vector<128x4xf32> -> vector<128x4xf32>
    %c0_66 = arith.constant 0 : index
    %c0_67 = arith.constant 0 : index
    %47 = vector.load %arg6[%c0_66, %c0_67] : memref<1x4xf32, #tpu.memory_space<vmem>>, vector<1x4xf32>
    %48 = vector.broadcast %47 : vector<1x4xf32> to vector<128x4xf32>
    %49 = arith.addf %46, %48 : vector<128x4xf32>
    %cst_68 = arith.constant 0.000000e+00 : f32
    %50 = vector.broadcast %cst_68 : f32 to vector<128x4xf32>
    %51 = arith.maximumf %49, %50 : vector<128x4xf32>
    %52 = arith.truncf %51 : vector<128x4xf32> to vector<128x4xbf16>
    %c0_69 = arith.constant 0 : index
    %c0_70 = arith.constant 0 : index
    %53 = vector.load %arg7[%c0_69, %c0_70] : memref<4x16xbf16, #tpu.memory_space<vmem>>, vector<4x16xbf16>
    %cst_71 = arith.constant dense<0.000000e+00> : vector<128x16xf32>
    %54 = tpu.matmul %52, %53, %cst_71 {dimension_numbers = #tpu.dot_dimension_numbers<[1], [0], [0], [1], [0, 0, 1, 1], [], []>} : vector<128x4xbf16>, vector<4x16xbf16>, vector<128x16xf32> -> vector<128x16xf32>
    %c0_72 = arith.constant 0 : index
    %c0_73 = arith.constant 0 : index
    %55 = vector.load %arg8[%c0_72, %c0_73] : memref<1x16xf32, #tpu.memory_space<vmem>>, vector<1x16xf32>
    %56 = vector.broadcast %55 : vector<1x16xf32> to vector<128x16xf32>
    %57 = arith.addf %54, %56 : vector<128x16xf32>
    %c0_74 = arith.constant 0 : index
    %c0_75 = arith.constant 0 : index
    %c0_76 = arith.constant 0 : index
    %c0_77 = arith.constant 0 : index
    %58 = vector.load %arg2[%c0_74, %c0_75, %c0_76, %c0_77] : memref<2x8x8x4xbf16, #tpu.memory_space<vmem>>, vector<2x8x8x4xbf16>
    %59 = vector.shape_cast %58 : vector<2x8x8x4xbf16> to vector<128x4xbf16>
    %c0_78 = arith.constant 0 : index
    %c0_79 = arith.constant 0 : index
    %60 = vector.load %arg9[%c0_78, %c0_79] : memref<4x16xbf16, #tpu.memory_space<vmem>>, vector<4x16xbf16>
    %cst_80 = arith.constant dense<0.000000e+00> : vector<128x16xf32>
    %61 = tpu.matmul %59, %60, %cst_80 {dimension_numbers = #tpu.dot_dimension_numbers<[1], [0], [0], [1], [0, 0, 1, 1], [], []>} : vector<128x4xbf16>, vector<4x16xbf16>, vector<128x16xf32> -> vector<128x16xf32>
    %c0_81 = arith.constant 0 : index
    %c0_82 = arith.constant 0 : index
    %62 = vector.load %arg10[%c0_81, %c0_82] : memref<1x16xf32, #tpu.memory_space<vmem>>, vector<1x16xf32>
    %63 = vector.broadcast %62 : vector<1x16xf32> to vector<128x16xf32>
    %64 = arith.addf %61, %63 : vector<128x16xf32>
    %65 = arith.addf %57, %64 : vector<128x16xf32>
    %cst_83 = arith.constant 0.000000e+00 : f32
    %66 = vector.broadcast %cst_83 : f32 to vector<128x16xf32>
    %67 = arith.maximumf %65, %66 : vector<128x16xf32>
    %68 = arith.truncf %67 : vector<128x16xf32> to vector<128x16xbf16>
    %69 = vector.shape_cast %68 : vector<128x16xbf16> to vector<2x8x8x16xbf16>
    %c0_84 = arith.constant 0 : index
    %c0_85 = arith.constant 0 : index
    %c0_86 = arith.constant 0 : index
    %c0_87 = arith.constant 0 : index
    %70 = vector.load %arg11[%c0_84, %c0_85, %c0_86, %c0_87] : memref<2x8x8x16xbf16, #tpu.memory_space<vmem>>, vector<2x8x8x16xbf16>
    tpu.vector_store %arg11[%c0_84, %c0_85, %c0_86, %c0_87], %69 {strides = array<i32>} : memref<2x8x8x16xbf16, #tpu.memory_space<vmem>>, vector<2x8x8x16xbf16>,
    return
  }
  func.func @transform_0(%arg0: i32) -> (i32, i32, i32, i32) {
    %c0_i32 = arith.constant 0 : i32
    %c0_i32_0 = arith.constant 0 : i32
    %c0_i32_1 = arith.constant 0 : i32
    %c0_i32_2 = arith.constant 0 : i32
    return %arg0, %c0_i32, %c0_i32_0, %c0_i32_1 : i32, i32, i32, i32
  }
  func.func @transform_1(%arg0: i32) -> (i32, i32, i32, i32) {
    %c0_i32 = arith.constant 0 : i32
    %c0_i32_0 = arith.constant 0 : i32
    %c0_i32_1 = arith.constant 0 : i32
    %c0_i32_2 = arith.constant 0 : i32
    return %arg0, %c0_i32, %c0_i32_0, %c0_i32_1 : i32, i32, i32, i32
  }
  func.func @transform_2(%arg0: i32) -> (i32, i32) {
    %c0_i32 = arith.constant 0 : i32
    %c0_i32_0 = arith.constant 0 : i32
    %c0_i32_1 = arith.constant 0 : i32
    return %c0_i32, %c0_i32_0 : i32, i32
  }
  func.func @transform_3(%arg0: i32) -> (i32, i32) {
    %c0_i32 = arith.constant 0 : i32
    %c0_i32_0 = arith.constant 0 : i32
    %c0_i32_1 = arith.constant 0 : i32
    return %c0_i32, %c0_i32_0 : i32, i32
  }
  func.func @transform_4(%arg0: i32) -> (i32, i32) {
    %c0_i32 = arith.constant 0 : i32
    %c0_i32_0 = arith.constant 0 : i32
    %c0_i32_1 = arith.constant 0 : i32
    return %c0_i32, %c0_i32_0 : i32, i32
  }
  func.func @transform_5(%arg0: i32) -> (i32, i32) {
    %c0_i32 = arith.constant 0 : i32
    %c0_i32_0 = arith.constant 0 : i32
    %c0_i32_1 = arith.constant 0 : i32
    return %c0_i32, %c0_i32_0 : i32, i32
  }
  func.func @transform_6(%arg0: i32) -> (i32, i32) {
    %c0_i32 = arith.constant 0 : i32
    %c0_i32_0 = arith.constant 0 : i32
    %c0_i32_1 = arith.constant 0 : i32
    return %c0_i32, %c0_i32_0 : i32, i32
  }
  func.func @transform_7(%arg0: i32) -> (i32, i32) {
    %c0_i32 = arith.constant 0 : i32
    %c0_i32_0 = arith.constant 0 : i32
    %c0_i32_1 = arith.constant 0 : i32
    return %c0_i32, %c0_i32_0 : i32, i32
  }
  func.func @transform_8(%arg0: i32) -> (i32, i32) {
    %c0_i32 = arith.constant 0 : i32
    %c0_i32_0 = arith.constant 0 : i32
    %c0_i32_1 = arith.constant 0 : i32
    return %c0_i32, %c0_i32_0 : i32, i32
  }
  func.func @transform_9(%arg0: i32) -> (i32, i32) {
    %c0_i32 = arith.constant 0 : i32
    %c0_i32_0 = arith.constant 0 : i32
    %c0_i32_1 = arith.constant 0 : i32
    return %c0_i32, %c0_i32_0 : i32, i32
  }
  func.func @transform_10(%arg0: i32) -> (i32, i32, i32, i32) {
    %c0_i32 = arith.constant 0 : i32
    %c0_i32_0 = arith.constant 0 : i32
    %c0_i32_1 = arith.constant 0 : i32
    %c0_i32_2 = arith.constant 0 : i32
    return %arg0, %c0_i32, %c0_i32_0, %c0_i32_1 : i32, i32, i32, i32
  }
}

</mosaic_0001>

<llo_original>
// kernel: bottleneck_forward_nhwc.1
$region0: #{bottleneck_forward_nhwc.1}
  #allocation0 [shape = 'u32[]', space=smem, size = 0x4, offset = 0x4, fixed_abs, tag = 'smem constant byte address 0x4 - core index']
  #allocation1 [shape = 'u32[144,128]{1,0:T(1,128)}', space=vmem, size = 0x12000, scoped, tag = 'internal scratch']
  #allocation2 [shape = 'f32[2,18,24,4]{3,2,1,0:T(8,128)}', space=vmem, size = 0x6c000, scoped, tag = 'scratch operand']
  %s0 = inlined_call_operand.vmem [shape: bf16[2,16,16,4], index: 0, kind: input, shape index: {}]
  %s1 = inlined_call_operand.vmem [shape: bf16[2,8,8,4], index: 1, kind: input, shape index: {}]
  %s2 = inlined_call_operand.vmem [shape: bf16[4,4], index: 2, kind: input, shape index: {}]
  %s3 = inlined_call_operand.vmem [shape: f32[1,4], index: 3, kind: input, shape index: {}]
  %s4 = inlined_call_operand.vmem [shape: bf16[36,4], index: 4, kind: input, shape index: {}]
  %s5 = inlined_call_operand.vmem [shape: f32[1,4], index: 5, kind: input, shape index: {}]
  %s6 = inlined_call_operand.vmem [shape: bf16[4,16], index: 6, kind: input, shape index: {}]
  %s7 = inlined_call_operand.vmem [shape: f32[1,16], index: 7, kind: input, shape index: {}]
  %s8 = inlined_call_operand.vmem [shape: bf16[4,16], index: 8, kind: input, shape index: {}]
  %s9 = inlined_call_operand.vmem [shape: f32[1,16], index: 9, kind: input, shape index: {}]
  %s10 = inlined_call_operand.hbm [shape: bf16[2,8,8,16], index: 10, kind: output, shape index: {}]
  %s11 = sld [smem:[#allocation0]]
  $region50: #{bottleneck_forward_nhwc.1} parent=0
    _
  %s13 = ssub.s32 1, %s11
  %s14 = scalar_select 0, %s13, %s11
  $region1: #{bottleneck_forward_nhwc.1} parent=0
    #allocation3 [shape = 'u8[32768]{0}', space=vmem, size = 0x8000, scoped, tag = 'output window, operand 0, single buffered']
    #allocation4 [shape = 's32[1]{0}', space=sflag, size = 0x4, scoped, tag = 'scoped memory for bottleneck_forward_nhwc.1']
    %15 = vsyncpa [#allocation4], 0
    // Predicated region
    $region2: #{bottleneck_forward_nhwc.1} parent=1 // pred_check
      _
    $region3: #{bottleneck_forward_nhwc.1} parent=1 // pred_check_branch
      %17 = sbr.rel (0) target = $region5
    $region4: #{bottleneck_forward_nhwc.1} parent=1 // pred_region
      _
    $region5: #{bottleneck_forward_nhwc.1} parent=1 // pred_fallthru
      _
    // Predicated region
    $region6: #{bottleneck_forward_nhwc.1} parent=1 // pred_check
      _
    $region7: #{bottleneck_forward_nhwc.1} parent=1 // pred_check_branch
      %19 = sbr.rel (0) target = $region9
    $region8: #{bottleneck_forward_nhwc.1} parent=1 // pred_region
      _
    $region9: #{bottleneck_forward_nhwc.1} parent=1 // pred_fallthru
      _
    // Predicated region
    $region10: #{bottleneck_forward_nhwc.1} parent=1 // pred_check
      _
    $region11: #{bottleneck_forward_nhwc.1} parent=1 // pred_check_branch
      %21 = sbr.rel (0) target = $region13
    $region12: #{bottleneck_forward_nhwc.1} parent=1 // pred_region
      _
    $region13: #{bottleneck_forward_nhwc.1} parent=1 // pred_fallthru
      _
    // Predicated region
    $region14: #{bottleneck_forward_nhwc.1} parent=1 // pred_check
      _
    $region15: #{bottleneck_forward_nhwc.1} parent=1 // pred_check_branch
      %23 = sbr.rel (0) target = $region17
    $region16: #{bottleneck_forward_nhwc.1} parent=1 // pred_region
      _
    $region17: #{bottleneck_forward_nhwc.1} parent=1 // pred_fallthru
      _
    // Predicated region
    $region18: #{bottleneck_forward_nhwc.1} parent=1 // pred_check
      _
    $region19: #{bottleneck_forward_nhwc.1} parent=1 // pred_check_branch
      %25 = sbr.rel (0) target = $region21
    $region20: #{bottleneck_forward_nhwc.1} parent=1 // pred_region
      _
    $region21: #{bottleneck_forward_nhwc.1} parent=1 // pred_fallthru
      _
    // Predicated region
    $region22: #{bottleneck_forward_nhwc.1} parent=1 // pred_check
      _
    $region23: #{bottleneck_forward_nhwc.1} parent=1 // pred_check_branch
      %27 = sbr.rel (0) target = $region25
    $region24: #{bottleneck_forward_nhwc.1} parent=1 // pred_region
      _
    $region25: #{bottleneck_forward_nhwc.1} parent=1 // pred_fallthru
      _
    // Predicated region
    $region26: #{bottleneck_forward_nhwc.1} parent=1 // pred_check
      _
    $region27: #{bottleneck_forward_nhwc.1} parent=1 // pred_check_branch
      %29 = sbr.rel (0) target = $region29
    $region28: #{bottleneck_forward_nhwc.1} parent=1 // pred_region
      _
    $region29: #{bottleneck_forward_nhwc.1} parent=1 // pred_fallthru
      _
    // Predicated region
    $region30: #{bottleneck_forward_nhwc.1} parent=1 // pred_check
      _
    $region31: #{bottleneck_forward_nhwc.1} parent=1 // pred_check_branch
      %31 = sbr.rel (0) target = $region33
    $region32: #{bottleneck_forward_nhwc.1} parent=1 // pred_region
      _
    $region33: #{bottleneck_forward_nhwc.1} parent=1 // pred_fallthru
      _
    // Predicated region
    $region34: #{bottleneck_forward_nhwc.1} parent=1 // pred_check
      _
    $region35: #{bottleneck_forward_nhwc.1} parent=1 // pred_check_branch
      %33 = sbr.rel (0) target = $region37
    $region36: #{bottleneck_forward_nhwc.1} parent=1 // pred_region
      _
    $region37: #{bottleneck_forward_nhwc.1} parent=1 // pred_fallthru
      _
    // Predicated region
    $region38: #{bottleneck_forward_nhwc.1} parent=1 // pred_check
      _
    $region39: #{bottleneck_forward_nhwc.1} parent=1 // pred_check_branch
      %35 = sbr.rel (0) target = $region41
    $region40: #{bottleneck_forward_nhwc.1} parent=1 // pred_region
      _
    $region41: #{bottleneck_forward_nhwc.1} parent=1 // pred_fallthru
      _
    %v37 = vld [vmem:[%s0] sm:$0xf]
    %v38 = vld [vmem:[%s0 + $0x4] sm:$0xf]
    %v39 = vld [vmem:[%s0 + $0x8] sm:$0xf]
    %v40 = vld [vmem:[%s0 + $0xc] sm:$0xf]
    %v41 = vld [vmem:[%s0 + $0x10] sm:$0xf]
    %v42 = vld [vmem:[%s0 + $0x14] sm:$0xf]
    %v43 = vld [vmem:[%s0 + $0x18] sm:$0xf]
    %v44 = vld [vmem:[%s0 + $0x1c] sm:$0xf]
    %v45 = vld [vmem:[%s0 + $0x20] sm:$0xf]
    %v46 = vld [vmem:[%s0 + $0x24] sm:$0xf]
    %v47 = vld [vmem:[%s0 + $0x28] sm:$0xf]
    %v48 = vld [vmem:[%s0 + $0x2c] sm:$0xf]
    %v49 = vld [vmem:[%s0 + $0x30] sm:$0xf]
    %v50 = vld [vmem:[%s0 + $0x34] sm:$0xf]
    %v51 = vld [vmem:[%s0 + $0x38] sm:$0xf]
    %v52 = vld [vmem:[%s0 + $0x3c] sm:$0xf]
    %v53 = vld [vmem:[%s0 + $0x40] sm:$0xf]
    %v54 = vld [vmem:[%s0 + $0x44] sm:$0xf]
    %v55 = vld [vmem:[%s0 + $0x48] sm:$0xf]
    %v56 = vld [vmem:[%s0 + $0x4c] sm:$0xf]
    %v57 = vld [vmem:[%s0 + $0x50] sm:$0xf]
    %v58 = vld [vmem:[%s0 + $0x54] sm:$0xf]
    %v59 = vld [vmem:[%s0 + $0x58] sm:$0xf]
    %v60 = vld [vmem:[%s0 + $0x5c] sm:$0xf]
    %v61 = vld [vmem:[%s0 + $0x60] sm:$0xf]
    %v62 = vld [vmem:[%s0 + $0x64] sm:$0xf]
    %v63 = vld [vmem:[%s0 + $0x68] sm:$0xf]
    %v64 = vld [vmem:[%s0 + $0x6c] sm:$0xf]
    %v65 = vld [vmem:[%s0 + $0x70] sm:$0xf]
    %v66 = vld [vmem:[%s0 + $0x74] sm:$0xf]
    %v67 = vld [vmem:[%s0 + $0x78] sm:$0xf]
    %v68 = vld [vmem:[%s0 + $0x7c] sm:$0xf]
    %v69 = vld [vmem:[%s0 + $0x80] sm:$0xf]
    %v70 = vld [vmem:[%s0 + $0x84] sm:$0xf]
    %v71 = vld [vmem:[%s0 + $0x88] sm:$0xf]
    %v72 = vld [vmem:[%s0 + $0x8c] sm:$0xf]
    %v73 = vld [vmem:[%s0 + $0x90] sm:$0xf]
    %v74 = vld [vmem:[%s0 + $0x94] sm:$0xf]
    %v75 = vld [vmem:[%s0 + $0x98] sm:$0xf]
    %v76 = vld [vmem:[%s0 + $0x9c] sm:$0xf]
    %v77 = vld [vmem:[%s0 + $0xa0] sm:$0xf]
    %v78 = vld [vmem:[%s0 + $0xa4] sm:$0xf]
    %v79 = vld [vmem:[%s0 + $0xa8] sm:$0xf]
    %v80 = vld [vmem:[%s0 + $0xac] sm:$0xf]
    %v81 = vld [vmem:[%s0 + $0xb0] sm:$0xf]
    %v82 = vld [vmem:[%s0 + $0xb4] sm:$0xf]
    %v83 = vld [vmem:[%s0 + $0xb8] sm:$0xf]
    %v84 = vld [vmem:[%s0 + $0xbc] sm:$0xf]
    %v85 = vld [vmem:[%s0 + $0xc0] sm:$0xf]
    %v86 = vld [vmem:[%s0 + $0xc4] sm:$0xf]
    %v87 = vld [vmem:[%s0 + $0xc8] sm:$0xf]
    %v88 = vld [vmem:[%s0 + $0xcc] sm:$0xf]
    %v89 = vld [vmem:[%s0 + $0xd0] sm:$0xf]
    %v90 = vld [vmem:[%s0 + $0xd4] sm:$0xf]
    %v91 = vld [vmem:[%s0 + $0xd8] sm:$0xf]
    %v92 = vld [vmem:[%s0 + $0xdc] sm:$0xf]
    %v93 = vld [vmem:[%s0 + $0xe0] sm:$0xf]
    %v94 = vld [vmem:[%s0 + $0xe4] sm:$0xf]
    %v95 = vld [vmem:[%s0 + $0xe8] sm:$0xf]
    %v96 = vld [vmem:[%s0 + $0xec] sm:$0xf]
    %v97 = vld [vmem:[%s0 + $0xf0] sm:$0xf]
    %v98 = vld [vmem:[%s0 + $0xf4] sm:$0xf]
    %v99 = vld [vmem:[%s0 + $0xf8] sm:$0xf]
    %v100 = vld [vmem:[%s0 + $0xfc] sm:$0xf]
    %v101 = vld [vmem:[%s2] sm:$0x3]
    %v102 = vld [vmem:[%s3] sm:$0x1]
    %v104 = vlaneseq
    %v105 = vshrl.u32 %v104, 7
    %v106 = vsub.s32 0, %v105
    %v107 = vrot.slane %v102, %v106
    %v173 = vunpack.c.l.b16 %v37
    %v174 = vunpack.c.l.b16 %v38
    %v175 = vunpack.c.l.b16 %v39
    %v176 = vunpack.c.l.b16 %v40
    %v177 = vunpack.c.l.b16 %v41
    %v178 = vunpack.c.l.b16 %v42
    %v179 = vunpack.c.l.b16 %v43
    %v180 = vunpack.c.l.b16 %v44
    %v181 = vunpack.c.l.b16 %v45
    %v182 = vunpack.c.l.b16 %v46
    %v183 = vunpack.c.l.b16 %v47
    %v184 = vunpack.c.l.b16 %v48
    %v185 = vunpack.c.l.b16 %v49
    %v186 = vunpack.c.l.b16 %v50
    %v187 = vunpack.c.l.b16 %v51
    %v188 = vunpack.c.l.b16 %v52
    %v189 = vunpack.c.l.b16 %v53
    %v190 = vunpack.c.l.b16 %v54
    %v191 = vunpack.c.l.b16 %v55
    %v192 = vunpack.c.l.b16 %v56
    %v193 = vunpack.c.l.b16 %v57
    %v194 = vunpack.c.l.b16 %v58
    %v195 = vunpack.c.l.b16 %v59
    %v196 = vunpack.c.l.b16 %v60
    %v197 = vunpack.c.l.b16 %v61
    %v198 = vunpack.c.l.b16 %v62
    %v199 = vunpack.c.l.b16 %v63
    %v200 = vunpack.c.l.b16 %v64
    %v201 = vunpack.c.l.b16 %v65
    %v202 = vunpack.c.l.b16 %v66
    %v203 = vunpack.c.l.b16 %v67
    %v204 = vunpack.c.l.b16 %v68
    %v205 = vunpack.c.l.b16 %v69
    %v206 = vunpack.c.l.b16 %v70
    %v207 = vunpack.c.l.b16 %v71
    %v208 = vunpack.c.l.b16 %v72
    %v209 = vunpack.c.l.b16 %v73
    %v210 = vunpack.c.l.b16 %v74
    %v211 = vunpack.c.l.b16 %v75
    %v212 = vunpack.c.l.b16 %v76
    %v213 = vunpack.c.l.b16 %v77
    %v214 = vunpack.c.l.b16 %v78
    %v215 = vunpack.c.l.b16 %v79
    %v216 = vunpack.c.l.b16 %v80
    %v217 = vunpack.c.l.b16 %v81
    %v218 = vunpack.c.l.b16 %v82
    %v219 = vunpack.c.l.b16 %v83
    %v220 = vunpack.c.l.b16 %v84
    %v221 = vunpack.c.l.b16 %v85
    %v222 = vunpack.c.l.b16 %v86
    %v223 = vunpack.c.l.b16 %v87
    %v224 = vunpack.c.l.b16 %v88
    %v225 = vunpack.c.l.b16 %v89
    %v226 = vunpack.c.l.b16 %v90
    %v227 = vunpack.c.l.b16 %v91
    %v228 = vunpack.c.l.b16 %v92
    %v229 = vunpack.c.l.b16 %v93
    %v230 = vunpack.c.l.b16 %v94
    %v231 = vunpack.c.l.b16 %v95
    %v232 = vunpack.c.l.b16 %v96
    %v233 = vunpack.c.l.b16 %v97
    %v234 = vunpack.c.l.b16 %v98
    %v235 = vunpack.c.l.b16 %v99
    %v236 = vunpack.c.l.b16 %v100
    %v237 = vpack.c.b16 %v174, %v173
    %v238 = vpack.c.b16 %v176, %v175
    %v239 = vpack.c.b16 %v178, %v177
    %v240 = vpack.c.b16 %v180, %v179
    %v241 = vpack.c.b16 %v182, %v181
    %v242 = vpack.c.b16 %v184, %v183
    %v243 = vpack.c.b16 %v186, %v185
    %v244 = vpack.c.b16 %v188, %v187
    %v245 = vpack.c.b16 %v190, %v189
    %v246 = vpack.c.b16 %v192, %v191
    %v247 = vpack.c.b16 %v194, %v193
    %v248 = vpack.c.b16 %v196, %v195
    %v249 = vpack.c.b16 %v198, %v197
    %v250 = vpack.c.b16 %v200, %v199
    %v251 = vpack.c.b16 %v202, %v201
    %v252 = vpack.c.b16 %v204, %v203
    %v253 = vpack.c.b16 %v206, %v205
    %v254 = vpack.c.b16 %v208, %v207
    %v255 = vpack.c.b16 %v210, %v209
    %v256 = vpack.c.b16 %v212, %v211
    %v257 = vpack.c.b16 %v214, %v213
    %v258 = vpack.c.b16 %v216, %v215
    %v259 = vpack.c.b16 %v218, %v217
    %v260 = vpack.c.b16 %v220, %v219
    %v261 = vpack.c.b16 %v222, %v221
    %v262 = vpack.c.b16 %v224, %v223
    %v263 = vpack.c.b16 %v226, %v225
    %v264 = vpack.c.b16 %v228, %v227
    %v265 = vpack.c.b16 %v230, %v229
    %v266 = vpack.c.b16 %v232, %v231
    %v267 = vpack.c.b16 %v234, %v233
    %v268 = vpack.c.b16 %v236, %v235
    %vm269 = vcmask 31744
    %v271 = vsel %vm269, %v237, 0
    %v274 = vsel %vm269, %v238, 0
    %v277 = vsel %vm269, %v239, 0
    %v280 = vsel %vm269, %v240, 0
    %v283 = vsel %vm269, %v241, 0
    %v286 = vsel %vm269, %v242, 0
    %v289 = vsel %vm269, %v243, 0
    %v292 = vsel %vm269, %v244, 0
    %v295 = vsel %vm269, %v245, 0
    %v298 = vsel %vm269, %v246, 0
    %v301 = vsel %vm269, %v247, 0
    %v304 = vsel %vm269, %v248, 0
    %v307 = vsel %vm269, %v249, 0
    %v310 = vsel %vm269, %v250, 0
    %v313 = vsel %vm269, %v251, 0
    %v316 = vsel %vm269, %v252, 0
    %v319 = vsel %vm269, %v253, 0
    %v322 = vsel %vm269, %v254, 0
    %v325 = vsel %vm269, %v255, 0
    %v328 = vsel %vm269, %v256, 0
    %v331 = vsel %vm269, %v257, 0
    %v334 = vsel %vm269, %v258, 0
    %v337 = vsel %vm269, %v259, 0
    %v340 = vsel %vm269, %v260, 0
    %v343 = vsel %vm269, %v261, 0
    %v346 = vsel %vm269, %v262, 0
    %v349 = vsel %vm269, %v263, 0
    %v352 = vsel %vm269, %v264, 0
    %v355 = vsel %vm269, %v265, 0
    %v358 = vsel %vm269, %v266, 0
    %v361 = vsel %vm269, %v267, 0
    %v364 = vsel %vm269, %v268, 0
    %vm366 = vcmask 1041408
    %v368 = vsel %vm366, %v101, 0
    %370 = vmatprep.subr.bf16.mxu0 0
    %371 = vmatpush1.bf16.msra.mxu0 %v368
    %372 = vmatprep.subr.bf16.mxu0 0
    %373 = vmatpush1.bf16.msra.mxu0 0
    %374 = vmatprep.subr.bf16.mxu0 0
    %375 = vmatpush1.bf16.msra.mxu0 0
    %376 = vmatprep.subr.bf16.mxu0 0
    %377 = vmatpush1.bf16.msra.mxu0 0
    %378 = vmatprep.subr.bf16.mxu0 0
    %379 = vmatpush1.bf16.msra.mxu0 0
    %380 = vmatprep.subr.bf16.mxu0 0
    %381 = vmatpush1.bf16.msra.mxu0 0
    %382 = vmatprep.subr.bf16.mxu0 0
    %383 = vmatpush1.bf16.msra.mxu0 0
    %384 = vmatprep.subr.bf16.mxu0 0
    %385 = vmatpush1.bf16.msra.mxu0 0
    %386 = vmatprep.subr.bf16.mxu0 0
    %387 = vmatpush1.bf16.msra.mxu0 0
    %388 = vmatprep.subr.bf16.mxu0 0
    %389 = vmatpush1.bf16.msra.mxu0 0
    %390 = vmatprep.subr.bf16.mxu0 0
    %391 = vmatpush1.bf16.msra.mxu0 0
    %392 = vmatprep.subr.bf16.mxu0 0
    %393 = vmatpush1.bf16.msra.mxu0 0
    %394 = vmatprep.subr.bf16.mxu0 0
    %395 = vmatpush1.bf16.msra.mxu0 0
    %396 = vmatprep.subr.bf16.mxu0 0
    %397 = vmatpush1.bf16.msra.mxu0 0
    %398 = vmatprep.subr.bf16.mxu0 0
    %399 = vmatpush1.bf16.msra.mxu0 0
    %400 = vmatprep.subr.bf16.mxu0 0
    %401 = vmatpush1.bf16.msra.mxu0 0
    %402 = vmatprep.mubr.bf16.mxu0 0
    %403 = vmatmul.mubr.bf16.gmra.mrb[0].mxu0 %v271
    %v404 = vpop.f32.mrb[0].mxu0
    %v405 = vadd.f32 %v107, %v404
    %v406 = vpop.f32.mrb[0].mxu0
    %v407 = vpop.f32.mrb[0].mxu0
    %v408 = vadd.f32 %v107, %v407
    %v409 = vpop.f32.mrb[0].mxu0
    %410 = vmatprep.mubr.bf16.mxu0 0
    %411 = vmatmul.mubr.bf16.gmra.mrb[0].mxu0 %v274
    %v412 = vpop.f32.mrb[0].mxu0
    %v413 = vadd.f32 %v107, %v412
    %v414 = vpop.f32.mrb[0].mxu0
    %v415 = vpop.f32.mrb[0].mxu0
    %v416 = vadd.f32 %v107, %v415
    %v417 = vpop.f32.mrb[0].mxu0
    %418 = vmatprep.mubr.bf16.mxu0 0
    %419 = vmatmul.mubr.bf16.gmra.mrb[0].mxu0 %v277
    %v420 = vpop.f32.mrb[0].mxu0
    %v421 = vadd.f32 %v107, %v420
    %v422 = vpop.f32.mrb[0].mxu0
    %v423 = vpop.f32.mrb[0].mxu0
    %v424 = vadd.f32 %v107, %v423
    %v425 = vpop.f32.mrb[0].mxu0
    %426 = vmatprep.mubr.bf16.mxu0 0
    %427 = vmatmul.mubr.bf16.gmra.mrb[0].mxu0 %v280
    %v428 = vpop.f32.mrb[0].mxu0
    %v429 = vadd.f32 %v107, %v428
    %v430 = vpop.f32.mrb[0].mxu0
    %v431 = vpop.f32.mrb[0].mxu0
    %v432 = vadd.f32 %v107, %v431
    %v433 = vpop.f32.mrb[0].mxu0
    %434 = vmatprep.mubr.bf16.mxu0 0
    %435 = vmatmul.mubr.bf16.gmra.mrb[0].mxu0 %v283
    %v436 = vpop.f32.mrb[0].mxu0
    %v437 = vadd.f32 %v107, %v436
    %v438 = vpop.f32.mrb[0].mxu0
    %v439 = vpop.f32.mrb[0].mxu0
    %v440 = vadd.f32 %v107, %v439
    %v441 = vpop.f32.mrb[0].mxu0
    %442 = vmatprep.mubr.bf16.mxu0 0
    %443 = vmatmul.mubr.bf16.gmra.mrb[0].mxu0 %v286
    %v444 = vpop.f32.mrb[0].mxu0
    %v445 = vadd.f32 %v107, %v444
    %v446 = vpop.f32.mrb[0].mxu0
    %v447 = vpop.f32.mrb[0].mxu0
    %v448 = vadd.f32 %v107, %v447
    %v449 = vpop.f32.mrb[0].mxu0
    %450 = vmatprep.mubr.bf16.mxu0 0
    %451 = vmatmul.mubr.bf16.gmra.mrb[0].mxu0 %v289
    %v452 = vpop.f32.mrb[0].mxu0
    %v453 = vadd.f32 %v107, %v452
    %v454 = vpop.f32.mrb[0].mxu0
    %v455 = vpop.f32.mrb[0].mxu0
    %v456 = vadd.f32 %v107, %v455
    %v457 = vpop.f32.mrb[0].mxu0
    %458 = vmatprep.mubr.bf16.mxu0 0
    %459 = vmatmul.mubr.bf16.gmra.mrb[0].mxu0 %v292
    %v460 = vpop.f32.mrb[0].mxu0
    %v461 = vadd.f32 %v107, %v460
    %v462 = vpop.f32.mrb[0].mxu0
    %v463 = vpop.f32.mrb[0].mxu0
    %v464 = vadd.f32 %v107, %v463
    %v465 = vpop.f32.mrb[0].mxu0
    %466 = vmatprep.mubr.bf16.mxu0 0
    %467 = vmatmul.mubr.bf16.gmra.mrb[0].mxu0 %v295
    %v468 = vpop.f32.mrb[0].mxu0
    %v469 = vadd.f32 %v107, %v468
    %v470 = vpop.f32.mrb[0].mxu0
    %v471 = vpop.f32.mrb[0].mxu0
    %v472 = vadd.f32 %v107, %v471
    %v473 = vpop.f32.mrb[0].mxu0
    %474 = vmatprep.mubr.bf16.mxu0 0
    %475 = vmatmul.mubr.bf16.gmra.mrb[0].mxu0 %v298
    %v476 = vpop.f32.mrb[0].mxu0
    %v477 = vadd.f32 %v107, %v476
    %v478 = vpop.f32.mrb[0].mxu0
    %v479 = vpop.f32.mrb[0].mxu0
    %v480 = vadd.f32 %v107, %v479
    %v481 = vpop.f32.mrb[0].mxu0
    %482 = vmatprep.mubr.bf16.mxu0 0
    %483 = vmatmul.mubr.bf16.gmra.mrb[0].mxu0 %v301
    %v484 = vpop.f32.mrb[0].mxu0
    %v485 = vadd.f32 %v107, %v484
    %v486 = vpop.f32.mrb[0].mxu0
    %v487 = vpop.f32.mrb[0].mxu0
    %v488 = vadd.f32 %v107, %v487
    %v489 = vpop.f32.mrb[0].mxu0
    %490 = vmatprep.mubr.bf16.mxu0 0
    %491 = vmatmul.mubr.bf16.gmra.mrb[0].mxu0 %v304
    %v492 = vpop.f32.mrb[0].mxu0
    %v493 = vadd.f32 %v107, %v492
    %v494 = vpop.f32.mrb[0].mxu0
    %v495 = vpop.f32.mrb[0].mxu0
    %v496 = vadd.f32 %v107, %v495
    %v497 = vpop.f32.mrb[0].mxu0
    %498 = vmatprep.mubr.bf16.mxu0 0
    %499 = vmatmul.mubr.bf16.gmra.mrb[0].mxu0 %v307
    %v500 = vpop.f32.mrb[0].mxu0
    %v501 = vadd.f32 %v107, %v500
    %v502 = vpop.f32.mrb[0].mxu0
    %v503 = vpop.f32.mrb[0].mxu0
    %v504 = vadd.f32 %v107, %v503
    %v505 = vpop.f32.mrb[0].mxu0
    %506 = vmatprep.mubr.bf16.mxu0 0
    %507 = vmatmul.mubr.bf16.gmra.mrb[0].mxu0 %v310
    %v508 = vpop.f32.mrb[0].mxu0
    %v509 = vadd.f32 %v107, %v508
    %v510 = vpop.f32.mrb[0].mxu0
    %v511 = vpop.f32.mrb[0].mxu0
    %v512 = vadd.f32 %v107, %v511
    %v513 = vpop.f32.mrb[0].mxu0
    %514 = vmatprep.mubr.bf16.mxu0 0
    %515 = vmatmul.mubr.bf16.gmra.mrb[0].mxu0 %v313
    %v516 = vpop.f32.mrb[0].mxu0
    %v517 = vadd.f32 %v107, %v516
    %v518 = vpop.f32.mrb[0].mxu0
    %v519 = vpop.f32.mrb[0].mxu0
    %v520 = vadd.f32 %v107, %v519
    %v521 = vpop.f32.mrb[0].mxu0
    %522 = vmatprep.mubr.bf16.mxu0 0
    %523 = vmatmul.mubr.bf16.gmra.mrb[0].mxu0 %v316
    %v524 = vpop.f32.mrb[0].mxu0
    %v525 = vadd.f32 %v107, %v524
    %v526 = vpop.f32.mrb[0].mxu0
    %v527 = vpop.f32.mrb[0].mxu0
    %v528 = vadd.f32 %v107, %v527
    %v529 = vpop.f32.mrb[0].mxu0
    %530 = vmatprep.mubr.bf16.mxu0 0
    %531 = vmatmul.mubr.bf16.gmra.mrb[0].mxu0 %v319
    %v532 = vpop.f32.mrb[0].mxu0
    %v533 = vadd.f32 %v107, %v532
    %v534 = vpop.f32.mrb[0].mxu0
    %v535 = vpop.f32.mrb[0].mxu0
    %v536 = vadd.f32 %v107, %v535
    %v537 = vpop.f32.mrb[0].mxu0
    %538 = vmatprep.mubr.bf16.mxu0 0
    %539 = vmatmul.mubr.bf16.gmra.mrb[0].mxu0 %v322
    %v540 = vpop.f32.mrb[0].mxu0
    %v541 = vadd.f32 %v107, %v540
    %v542 = vpop.f32.mrb[0].mxu0
    %v543 = vpop.f32.mrb[0].mxu0
    %v544 = vadd.f32 %v107, %v543
    %v545 = vpop.f32.mrb[0].mxu0
    %546 = vmatprep.mubr.bf16.mxu0 0
    %547 = vmatmul.mubr.bf16.gmra.mrb[0].mxu0 %v325
    %v548 = vpop.f32.mrb[0].mxu0
    %v549 = vadd.f32 %v107, %v548
    %v550 = vpop.f32.mrb[0].mxu0
    %v551 = vpop.f32.mrb[0].mxu0
    %v552 = vadd.f32 %v107, %v551
    %v553 = vpop.f32.mrb[0].mxu0
    %554 = vmatprep.mubr.bf16.mxu0 0
    %555 = vmatmul.mubr.bf16.gmra.mrb[0].mxu0 %v328
    %v556 = vpop.f32.mrb[0].mxu0
    %v557 = vadd.f32 %v107, %v556
    %v558 = vpop.f32.mrb[0].mxu0
    %v559 = vpop.f32.mrb[0].mxu0
    %v560 = vadd.f32 %v107, %v559
    %v561 = vpop.f32.mrb[0].mxu0
    %562 = vmatprep.mubr.bf16.mxu0 0
    %563 = vmatmul.mubr.bf16.gmra.mrb[0].mxu0 %v331
    %v564 = vpop.f32.mrb[0].mxu0
    %v565 = vadd.f32 %v107, %v564
    %v566 = vpop.f32.mrb[0].mxu0
    %v567 = vpop.f32.mrb[0].mxu0
    %v568 = vadd.f32 %v107, %v567
    %v569 = vpop.f32.mrb[0].mxu0
    %570 = vmatprep.mubr.bf16.mxu0 0
    %571 = vmatmul.mubr.bf16.gmra.mrb[0].mxu0 %v334
    %v572 = vpop.f32.mrb[0].mxu0
    %v573 = vadd.f32 %v107, %v572
    %v574 = vpop.f32.mrb[0].mxu0
    %v575 = vpop.f32.mrb[0].mxu0
    %v576 = vadd.f32 %v107, %v575
    %v577 = vpop.f32.mrb[0].mxu0
    %578 = vmatprep.mubr.bf16.mxu0 0
    %579 = vmatmul.mubr.bf16.gmra.mrb[0].mxu0 %v337
    %v580 = vpop.f32.mrb[0].mxu0
    %v581 = vadd.f32 %v107, %v580
    %v582 = vpop.f32.mrb[0].mxu0
    %v583 = vpop.f32.mrb[0].mxu0
    %v584 = vadd.f32 %v107, %v583
    %v585 = vpop.f32.mrb[0].mxu0
    %586 = vmatprep.mubr.bf16.mxu0 0
    %587 = vmatmul.mubr.bf16.gmra.mrb[0].mxu0 %v340
    %v588 = vpop.f32.mrb[0].mxu0
    %v589 = vadd.f32 %v107, %v588
    %v590 = vpop.f32.mrb[0].mxu0
    %v591 = vpop.f32.mrb[0].mxu0
    %v592 = vadd.f32 %v107, %v591
    %v593 = vpop.f32.mrb[0].mxu0
    %594 = vmatprep.mubr.bf16.mxu0 0
    %595 = vmatmul.mubr.bf16.gmra.mrb[0].mxu0 %v343
    %v596 = vpop.f32.mrb[0].mxu0
    %v597 = vadd.f32 %v107, %v596
    %v598 = vpop.f32.mrb[0].mxu0
    %v599 = vpop.f32.mrb[0].mxu0
    %v600 = vadd.f32 %v107, %v599
    %v601 = vpop.f32.mrb[0].mxu0
    %602 = vmatprep.mubr.bf16.mxu0 0
    %603 = vmatmul.mubr.bf16.gmra.mrb[0].mxu0 %v346
    %v604 = vpop.f32.mrb[0].mxu0
    %v605 = vadd.f32 %v107, %v604
    %v606 = vpop.f32.mrb[0].mxu0
    %v607 = vpop.f32.mrb[0].mxu0
    %v608 = vadd.f32 %v107, %v607
    %v609 = vpop.f32.mrb[0].mxu0
    %610 = vmatprep.mubr.bf16.mxu0 0
    %611 = vmatmul.mubr.bf16.gmra.mrb[0].mxu0 %v349
    %v612 = vpop.f32.mrb[0].mxu0
    %v613 = vadd.f32 %v107, %v612
    %v614 = vpop.f32.mrb[0].mxu0
    %v615 = vpop.f32.mrb[0].mxu0
    %v616 = vadd.f32 %v107, %v615
    %v617 = vpop.f32.mrb[0].mxu0
    %618 = vmatprep.mubr.bf16.mxu0 0
    %619 = vmatmul.mubr.bf16.gmra.mrb[0].mxu0 %v352
    %v620 = vpop.f32.mrb[0].mxu0
    %v621 = vadd.f32 %v107, %v620
    %v622 = vpop.f32.mrb[0].mxu0
    %v623 = vpop.f32.mrb[0].mxu0
    %v624 = vadd.f32 %v107, %v623
    %v625 = vpop.f32.mrb[0].mxu0
    %626 = vmatprep.mubr.bf16.mxu0 0
    %627 = vmatmul.mubr.bf16.gmra.mrb[0].mxu0 %v355
    %v628 = vpop.f32.mrb[0].mxu0
    %v629 = vadd.f32 %v107, %v628
    %v630 = vpop.f32.mrb[0].mxu0
    %v631 = vpop.f32.mrb[0].mxu0
    %v632 = vadd.f32 %v107, %v631
    %v633 = vpop.f32.mrb[0].mxu0
    %634 = vmatprep.mubr.bf16.mxu0 0
    %635 = vmatmul.mubr.bf16.gmra.mrb[0].mxu0 %v358
    %v636 = vpop.f32.mrb[0].mxu0
    %v637 = vadd.f32 %v107, %v636
    %v638 = vpop.f32.mrb[0].mxu0
    %v639 = vpop.f32.mrb[0].mxu0
    %v640 = vadd.f32 %v107, %v639
    %v641 = vpop.f32.mrb[0].mxu0
    %642 = vmatprep.mubr.bf16.mxu0 0
    %643 = vmatmul.mubr.bf16.gmra.mrb[0].mxu0 %v361
    %v644 = vpop.f32.mrb[0].mxu0
    %v645 = vadd.f32 %v107, %v644
    %v646 = vpop.f32.mrb[0].mxu0
    %v647 = vpop.f32.mrb[0].mxu0
    %v648 = vadd.f32 %v107, %v647
    %v649 = vpop.f32.mrb[0].mxu0
    %650 = vmatprep.mubr.bf16.mxu0 0
    %651 = vmatmul.mubr.bf16.gmra.mrb[0].mxu0 %v364
    %v652 = vpop.f32.mrb[0].mxu0
    %v653 = vadd.f32 %v107, %v652
    %v654 = vpop.f32.mrb[0].mxu0
    %v655 = vpop.f32.mrb[0].mxu0
    %v656 = vadd.f32 %v107, %v655
    %v657 = vpop.f32.mrb[0].mxu0
    %658 = vdwg.mxu0
    %v659 = vmax.f32 %v405, 0.0
    %v660 = vmax.f32 %v408, 0.0
    %v661 = vmax.f32 %v413, 0.0
    %v662 = vmax.f32 %v416, 0.0
    %v663 = vmax.f32 %v421, 0.0
    %v664 = vmax.f32 %v424, 0.0
    %v665 = vmax.f32 %v429, 0.0
    %v666 = vmax.f32 %v432, 0.0
    %v667 = vmax.f32 %v437, 0.0
    %v668 = vmax.f32 %v440, 0.0
    %v669 = vmax.f32 %v445, 0.0
    %v670 = vmax.f32 %v448, 0.0
    %v671 = vmax.f32 %v453, 0.0
    %v672 = vmax.f32 %v456, 0.0
    %v673 = vmax.f32 %v461, 0.0
    %v674 = vmax.f32 %v464, 0.0
    %v675 = vmax.f32 %v469, 0.0
    %v676 = vmax.f32 %v472, 0.0
    %v677 = vmax.f32 %v477, 0.0
    %v678 = vmax.f32 %v480, 0.0
    %v679 = vmax.f32 %v485, 0.0
    %v680 = vmax.f32 %v488, 0.0
    %v681 = vmax.f32 %v493, 0.0
    %v682 = vmax.f32 %v496, 0.0
    %v683 = vmax.f32 %v501, 0.0
    %v684 = vmax.f32 %v504, 0.0
    %v685 = vmax.f32 %v509, 0.0
    %v686 = vmax.f32 %v512, 0.0
    %v687 = vmax.f32 %v517, 0.0
    %v688 = vmax.f32 %v520, 0.0
    %v689 = vmax.f32 %v525, 0.0
    %v690 = vmax.f32 %v528, 0.0
    %v691 = vmax.f32 %v533, 0.0
    %v692 = vmax.f32 %v536, 0.0
    %v693 = vmax.f32 %v541, 0.0
    %v694 = vmax.f32 %v544, 0.0
    %v695 = vmax.f32 %v549, 0.0
    %v696 = vmax.f32 %v552, 0.0
    %v697 = vmax.f32 %v557, 0.0
    %v698 = vmax.f32 %v560, 0.0
    %v699 = vmax.f32 %v565, 0.0
    %v700 = vmax.f32 %v568, 0.0
    %v701 = vmax.f32 %v573, 0.0
    %v702 = vmax.f32 %v576, 0.0
    %v703 = vmax.f32 %v581, 0.0
    %v704 = vmax.f32 %v584, 0.0
    %v705 = vmax.f32 %v589, 0.0
    %v706 = vmax.f32 %v592, 0.0
    %v707 = vmax.f32 %v597, 0.0
    %v708 = vmax.f32 %v600, 0.0
    %v709 = vmax.f32 %v605, 0.0
    %v710 = vmax.f32 %v608, 0.0
    %v711 = vmax.f32 %v613, 0.0
    %v712 = vmax.f32 %v616, 0.0
    %v713 = vmax.f32 %v621, 0.0
    %v714 = vmax.f32 %v624, 0.0
    %v715 = vmax.f32 %v629, 0.0
    %v716 = vmax.f32 %v632, 0.0
    %v717 = vmax.f32 %v637, 0.0
    %v718 = vmax.f32 %v640, 0.0
    %v719 = vmax.f32 %v645, 0.0
    %v720 = vmax.f32 %v648, 0.0
    %v721 = vmax.f32 %v653, 0.0
    %v722 = vmax.f32 %v656, 0.0
    %723 = vst.msk [vmem:[#allocation2] sm:$0xff] %vm269, 0.0
    %724 = vst.msk [vmem:[#allocation2 + $0x8] sm:$0xff] %vm269, 0.0
    %725 = vst.msk [vmem:[#allocation2 + $0x10] sm:$0xff] %vm269, 0.0
    %726 = vst.msk [vmem:[#allocation2 + $0x1b0] sm:$0xff] %vm269, 0.0
    %727 = vst.msk [vmem:[#allocation2 + $0x1b8] sm:$0xff] %vm269, 0.0
    %728 = vst.msk [vmem:[#allocation2 + $0x1c0] sm:$0xff] %vm269, 0.0
    %s729 = scalar_lea.vmem [#allocation2], 408
    %730 = vst.msk [vmem:[%s729] sm:$0xff] %vm269, 0.0
    %731 = vst.msk [vmem:[%s729 + $0x8] sm:$0xff] %vm269, 0.0
    %732 = vst.msk [vmem:[%s729 + $0x10] sm:$0xff] %vm269, 0.0
    %733 = vst.msk [vmem:[%s729 + $0x1b0] sm:$0xff] %vm269, 0.0
    %734 = vst.msk [vmem:[%s729 + $0x1b8] sm:$0xff] %vm269, 0.0
    %735 = vst.msk [vmem:[%s729 + $0x1c0] sm:$0xff] %vm269, 0.0
    %vm736 = vcmask 24576
    %737 = vst.msk [vmem:[#allocation2] sm:$0x1] %vm736, 0.0
    %738 = vst.msk [vmem:[#allocation2 + $0x18] sm:$0x1] %vm736, 0.0
    %739 = vst.msk [vmem:[#allocation2 + $0x30] sm:$0x1] %vm736, 0.0
    %740 = vst.msk [vmem:[#allocation2 + $0x48] sm:$0x1] %vm736, 0.0
    %741 = vst.msk [vmem:[#allocation2 + $0x60] sm:$0x1] %vm736, 0.0
    %742 = vst.msk [vmem:[#allocation2 + $0x78] sm:$0x1] %vm736, 0.0
    %743 = vst.msk [vmem:[#allocation2 + $0x90] sm:$0x1] %vm736, 0.0
    %744 = vst.msk [vmem:[#allocation2 + $0xa8] sm:$0x1] %vm736, 0.0
    %745 = vst.msk [vmem:[#allocation2 + $0xc0] sm:$0x1] %vm736, 0.0
    %746 = vst.msk [vmem:[#allocation2 + $0xd8] sm:$0x1] %vm736, 0.0
    %747 = vst.msk [vmem:[#allocation2 + $0xf0] sm:$0x1] %vm736, 0.0
    %748 = vst.msk [vmem:[#allocation2 + $0x108] sm:$0x1] %vm736, 0.0
    %749 = vst.msk [vmem:[#allocation2 + $0x120] sm:$0x1] %vm736, 0.0
    %750 = vst.msk [vmem:[#allocation2 + $0x138] sm:$0x1] %vm736, 0.0
    %751 = vst.msk [vmem:[#allocation2 + $0x150] sm:$0x1] %vm736, 0.0
    %752 = vst.msk [vmem:[#allocation2 + $0x168] sm:$0x1] %vm736, 0.0
    %753 = vst.msk [vmem:[#allocation2 + $0x180] sm:$0x1] %vm736, 0.0
    %754 = vst.msk [vmem:[#allocation2 + $0x198] sm:$0x1] %vm736, 0.0
    %755 = vst.msk [vmem:[#allocation2 + $0x1b0] sm:$0x1] %vm736, 0.0
    %756 = vst.msk [vmem:[#allocation2 + $0x1c8] sm:$0x1] %vm736, 0.0
    %757 = vst.msk [vmem:[#allocation2 + $0x1e0] sm:$0x1] %vm736, 0.0
    %758 = vst.msk [vmem:[#allocation2 + $0x1f8] sm:$0x1] %vm736, 0.0
    %759 = vst.msk [vmem:[#allocation2 + $0x210] sm:$0x1] %vm736, 0.0
    %760 = vst.msk [vmem:[#allocation2 + $0x228] sm:$0x1] %vm736, 0.0
    %761 = vst.msk [vmem:[#allocation2 + $0x240] sm:$0x1] %vm736, 0.0
    %762 = vst.msk [vmem:[#allocation2 + $0x258] sm:$0x1] %vm736, 0.0
    %763 = vst.msk [vmem:[#allocation2 + $0x270] sm:$0x1] %vm736, 0.0
    %764 = vst.msk [vmem:[#allocation2 + $0x288] sm:$0x1] %vm736, 0.0
    %765 = vst.msk [vmem:[#allocation2 + $0x2a0] sm:$0x1] %vm736, 0.0
    %766 = vst.msk [vmem:[#allocation2 + $0x2b8] sm:$0x1] %vm736, 0.0
    %767 = vst.msk [vmem:[#allocation2 + $0x2d0] sm:$0x1] %vm736, 0.0
    %768 = vst.msk [vmem:[#allocation2 + $0x2e8] sm:$0x1] %vm736, 0.0
    %769 = vst.msk [vmem:[#allocation2 + $0x300] sm:$0x1] %vm736, 0.0
    %770 = vst.msk [vmem:[#allocation2 + $0x318] sm:$0x1] %vm736, 0.0
    %771 = vst.msk [vmem:[#allocation2 + $0x330] sm:$0x1] %vm736, 0.0
    %772 = vst.msk [vmem:[#allocation2 + $0x348] sm:$0x1] %vm736, 0.0
    %773 = vst.msk [vmem:[#allocation2 + $0x11] sm:$0x1] %vm736, 0.0
    %774 = vst.msk [vmem:[#allocation2 + $0x29] sm:$0x1] %vm736, 0.0
    %775 = vst.msk [vmem:[#allocation2 + $0x41] sm:$0x1] %vm736, 0.0
    %776 = vst.msk [vmem:[#allocation2 + $0x59] sm:$0x1] %vm736, 0.0
    %777 = vst.msk [vmem:[#allocation2 + $0x71] sm:$0x1] %vm736, 0.0
    %778 = vst.msk [vmem:[#allocation2 + $0x89] sm:$0x1] %vm736, 0.0
    %779 = vst.msk [vmem:[#allocation2 + $0xa1] sm:$0x1] %vm736, 0.0
    %780 = vst.msk [vmem:[#allocation2 + $0xb9] sm:$0x1] %vm736, 0.0
    %781 = vst.msk [vmem:[#allocation2 + $0xd1] sm:$0x1] %vm736, 0.0
    %782 = vst.msk [vmem:[#allocation2 + $0xe9] sm:$0x1] %vm736, 0.0
    %783 = vst.msk [vmem:[#allocation2 + $0x101] sm:$0x1] %vm736, 0.0
    %784 = vst.msk [vmem:[#allocation2 + $0x119] sm:$0x1] %vm736, 0.0
    %785 = vst.msk [vmem:[#allocation2 + $0x131] sm:$0x1] %vm736, 0.0
    %786 = vst.msk [vmem:[#allocation2 + $0x149] sm:$0x1] %vm736, 0.0
    %787 = vst.msk [vmem:[#allocation2 + $0x161] sm:$0x1] %vm736, 0.0
    %788 = vst.msk [vmem:[#allocation2 + $0x179] sm:$0x1] %vm736, 0.0
    %789 = vst.msk [vmem:[#allocation2 + $0x191] sm:$0x1] %vm736, 0.0
    %790 = vst.msk [vmem:[#allocation2 + $0x1a9] sm:$0x1] %vm736, 0.0
    %791 = vst.msk [vmem:[#allocation2 + $0x1c1] sm:$0x1] %vm736, 0.0
    %792 = vst.msk [vmem:[#allocation2 + $0x1d9] sm:$0x1] %vm736, 0.0
    %793 = vst.msk [vmem:[#allocation2 + $0x1f1] sm:$0x1] %vm736, 0.0
    %794 = vst.msk [vmem:[#allocation2 + $0x209] sm:$0x1] %vm736, 0.0
    %795 = vst.msk [vmem:[#allocation2 + $0x221] sm:$0x1] %vm736, 0.0
    %796 = vst.msk [vmem:[#allocation2 + $0x239] sm:$0x1] %vm736, 0.0
    %797 = vst.msk [vmem:[#allocation2 + $0x251] sm:$0x1] %vm736, 0.0
    %798 = vst.msk [vmem:[#allocation2 + $0x269] sm:$0x1] %vm736, 0.0
    %799 = vst.msk [vmem:[#allocation2 + $0x281] sm:$0x1] %vm736, 0.0
    %800 = vst.msk [vmem:[#allocation2 + $0x299] sm:$0x1] %vm736, 0.0
    %801 = vst.msk [vmem:[#allocation2 + $0x2b1] sm:$0x1] %vm736, 0.0
    %802 = vst.msk [vmem:[#allocation2 + $0x2c9] sm:$0x1] %vm736, 0.0
    %803 = vst.msk [vmem:[#allocation2 + $0x2e1] sm:$0x1] %vm736, 0.0
    %804 = vst.msk [vmem:[#allocation2 + $0x2f9] sm:$0x1] %vm736, 0.0
    %805 = vst.msk [vmem:[#allocation2 + $0x311] sm:$0x1] %vm736, 0.0
    %806 = vst.msk [vmem:[#allocation2 + $0x329] sm:$0x1] %vm736, 0.0
    %807 = vst.msk [vmem:[#allocation2 + $0x341] sm:$0x1] %vm736, 0.0
    %808 = vst.msk [vmem:[#allocation2 + $0x359] sm:$0x1] %vm736, 0.0
    %s809 = scalar_lea.vmem [#allocation2], 24
    %810 = vst.msk [vmem:[%s809 + $0x1] sm:$0xff] %vm269, %v659
    %811 = vst.msk [vmem:[%s809 + $0x9] sm:$0xff] %vm269, %v660
    %812 = vst.msk [vmem:[%s809 + $0x19] sm:$0xff] %vm269, %v661
    %813 = vst.msk [vmem:[%s809 + $0x21] sm:$0xff] %vm269, %v662
    %814 = vst.msk [vmem:[%s809 + $0x31] sm:$0xff] %vm269, %v663
    %815 = vst.msk [vmem:[%s809 + $0x39] sm:$0xff] %vm269, %v664
    %816 = vst.msk [vmem:[%s809 + $0x49] sm:$0xff] %vm269, %v665
    %817 = vst.msk [vmem:[%s809 + $0x51] sm:$0xff] %vm269, %v666
    %818 = vst.msk [vmem:[%s809 + $0x61] sm:$0xff] %vm269, %v667
    %819 = vst.msk [vmem:[%s809 + $0x69] sm:$0xff] %vm269, %v668
    %820 = vst.msk [vmem:[%s809 + $0x79] sm:$0xff] %vm269, %v669
    %821 = vst.msk [vmem:[%s809 + $0x81] sm:$0xff] %vm269, %v670
    %822 = vst.msk [vmem:[%s809 + $0x91] sm:$0xff] %vm269, %v671
    %823 = vst.msk [vmem:[%s809 + $0x99] sm:$0xff] %vm269, %v672
    %824 = vst.msk [vmem:[%s809 + $0xa9] sm:$0xff] %vm269, %v673
    %825 = vst.msk [vmem:[%s809 + $0xb1] sm:$0xff] %vm269, %v674
    %826 = vst.msk [vmem:[%s809 + $0xc1] sm:$0xff] %vm269, %v675
    %827 = vst.msk [vmem:[%s809 + $0xc9] sm:$0xff] %vm269, %v676
    %828 = vst.msk [vmem:[%s809 + $0xd9] sm:$0xff] %vm269, %v677
    %829 = vst.msk [vmem:[%s809 + $0xe1] sm:$0xff] %vm269, %v678
    %830 = vst.msk [vmem:[%s809 + $0xf1] sm:$0xff] %vm269, %v679
    %831 = vst.msk [vmem:[%s809 + $0xf9] sm:$0xff] %vm269, %v680
    %832 = vst.msk [vmem:[%s809 + $0x109] sm:$0xff] %vm269, %v681
    %833 = vst.msk [vmem:[%s809 + $0x111] sm:$0xff] %vm269, %v682
    %834 = vst.msk [vmem:[%s809 + $0x121] sm:$0xff] %vm269, %v683
    %835 = vst.msk [vmem:[%s809 + $0x129] sm:$0xff] %vm269, %v684
    %836 = vst.msk [vmem:[%s809 + $0x139] sm:$0xff] %vm269, %v685
    %837 = vst.msk [vmem:[%s809 + $0x141] sm:$0xff] %vm269, %v686
    %838 = vst.msk [vmem:[%s809 + $0x151] sm:$0xff] %vm269, %v687
    %839 = vst.msk [vmem:[%s809 + $0x159] sm:$0xff] %vm269, %v688
    %840 = vst.msk [vmem:[%s809 + $0x169] sm:$0xff] %vm269, %v689
    %841 = vst.msk [vmem:[%s809 + $0x171] sm:$0xff] %vm269, %v690
    %842 = vst.msk [vmem:[%s809 + $0x1b1] sm:$0xff] %vm269, %v691
    %843 = vst.msk [vmem:[%s809 + $0x1b9] sm:$0xff] %vm269, %v692
    %844 = vst.msk [vmem:[%s809 + $0x1c9] sm:$0xff] %vm269, %v693
    %845 = vst.msk [vmem:[%s809 + $0x1d1] sm:$0xff] %vm269, %v694
    %846 = vst.msk [vmem:[%s809 + $0x1e1] sm:$0xff] %vm269, %v695
    %847 = vst.msk [vmem:[%s809 + $0x1e9] sm:$0xff] %vm269, %v696
    %848 = vst.msk [vmem:[%s809 + $0x1f9] sm:$0xff] %vm269, %v697
    %849 = vst.msk [vmem:[%s809 + $0x201] sm:$0xff] %vm269, %v698
    %850 = vst.msk [vmem:[%s809 + $0x211] sm:$0xff] %vm269, %v699
    %851 = vst.msk [vmem:[%s809 + $0x219] sm:$0xff] %vm269, %v700
    %852 = vst.msk [vmem:[%s809 + $0x229] sm:$0xff] %vm269, %v701
    %853 = vst.msk [vmem:[%s809 + $0x231] sm:$0xff] %vm269, %v702
    %854 = vst.msk [vmem:[%s809 + $0x241] sm:$0xff] %vm269, %v703
    %855 = vst.msk [vmem:[%s809 + $0x249] sm:$0xff] %vm269, %v704
    %856 = vst.msk [vmem:[%s809 + $0x259] sm:$0xff] %vm269, %v705
    %857 = vst.msk [vmem:[%s809 + $0x261] sm:$0xff] %vm269, %v706
    %858 = vst.msk [vmem:[%s809 + $0x271] sm:$0xff] %vm269, %v707
    %859 = vst.msk [vmem:[%s809 + $0x279] sm:$0xff] %vm269, %v708
    %860 = vst.msk [vmem:[%s809 + $0x289] sm:$0xff] %vm269, %v709
    %861 = vst.msk [vmem:[%s809 + $0x291] sm:$0xff] %vm269, %v710
    %862 = vst.msk [vmem:[%s809 + $0x2a1] sm:$0xff] %vm269, %v711
    %863 = vst.msk [vmem:[%s809 + $0x2a9] sm:$0xff] %vm269, %v712
    %864 = vst.msk [vmem:[%s809 + $0x2b9] sm:$0xff] %vm269, %v713
    %865 = vst.msk [vmem:[%s809 + $0x2c1] sm:$0xff] %vm269, %v714
    %866 = vst.msk [vmem:[%s809 + $0x2d1] sm:$0xff] %vm269, %v715
    %867 = vst.msk [vmem:[%s809 + $0x2d9] sm:$0xff] %vm269, %v716
    %868 = vst.msk [vmem:[%s809 + $0x2e9] sm:$0xff] %vm269, %v717
    %869 = vst.msk [vmem:[%s809 + $0x2f1] sm:$0xff] %vm269, %v718
    %870 = vst.msk [vmem:[%s809 + $0x301] sm:$0xff] %vm269, %v719
    %871 = vst.msk [vmem:[%s809 + $0x309] sm:$0xff] %vm269, %v720
    %872 = vst.msk [vmem:[%s809 + $0x319] sm:$0xff] %vm269, %v721
    %873 = vst.msk [vmem:[%s809 + $0x321] sm:$0xff] %vm269, %v722
    %v874 = vld [vmem:[#allocation2] ss:$2 sm:$0xff]
    %s875 = scalar_lea.vmem [#allocation2], 48
    %v876 = vld [vmem:[%s875] ss:$2 sm:$0xff]
    %s877 = scalar_lea.vmem [#allocation2], 96
    %v878 = vld [vmem:[%s877] ss:$2 sm:$0xff]
    %s879 = scalar_lea.vmem [#allocation2], 144
    %v880 = vld [vmem:[%s879] ss:$2 sm:$0xff]
    %s881 = scalar_lea.vmem [#allocation2], 192
    %v882 = vld [vmem:[%s881] ss:$2 sm:$0xff]
    %s883 = scalar_lea.vmem [#allocation2], 240
    %v884 = vld [vmem:[%s883] ss:$2 sm:$0xff]
    %s885 = scalar_lea.vmem [#allocation2], 288
    %v886 = vld [vmem:[%s885] ss:$2 sm:$0xff]
    %s887 = scalar_lea.vmem [#allocation2], 336
    %v888 = vld [vmem:[%s887] ss:$2 sm:$0xff]
    %s889 = scalar_lea.vmem [#allocation2], 432
    %v890 = vld [vmem:[%s889] ss:$2 sm:$0xff]
    %s891 = scalar_lea.vmem [#allocation2], 480
    %v892 = vld [vmem:[%s891] ss:$2 sm:$0xff]
    %s893 = scalar_lea.vmem [#allocation2], 528
    %v894 = vld [vmem:[%s893] ss:$2 sm:$0xff]
    %s895 = scalar_lea.vmem [#allocation2], 576
    %v896 = vld [vmem:[%s895] ss:$2 sm:$0xff]
    %s897 = scalar_lea.vmem [#allocation2], 624
    %v898 = vld [vmem:[%s897] ss:$2 sm:$0xff]
    %s899 = scalar_lea.vmem [#allocation2], 672
    %v900 = vld [vmem:[%s899] ss:$2 sm:$0xff]
    %s901 = scalar_lea.vmem [#allocation2], 720
    %v902 = vld [vmem:[%s901] ss:$2 sm:$0xff]
    %s903 = scalar_lea.vmem [#allocation2], 768
    %v904 = vld [vmem:[%s903] ss:$2 sm:$0xff]
    %v905 = vpack.c.bf16 %v876, %v874
    %v906 = vpack.c.bf16 %v880, %v878
    %v907 = vpack.c.bf16 %v884, %v882
    %v908 = vpack.c.bf16 %v888, %v886
    %v909 = vpack.c.bf16 %v892, %v890
    %v910 = vpack.c.bf16 %v896, %v894
    %v911 = vpack.c.bf16 %v900, %v898
    %v912 = vpack.c.bf16 %v904, %v902
    %s913 = scalar_lea.vmem [#allocation2], 1
    %v914 = vld [vmem:[%s913] ss:$2 sm:$0xff]
    %s915 = scalar_lea.vmem [#allocation2], 49
    %v916 = vld [vmem:[%s915] ss:$2 sm:$0xff]
    %s917 = scalar_lea.vmem [#allocation2], 97
    %v918 = vld [vmem:[%s917] ss:$2 sm:$0xff]
    %s919 = scalar_lea.vmem [#allocation2], 145
    %v920 = vld [vmem:[%s919] ss:$2 sm:$0xff]
    %s921 = scalar_lea.vmem [#allocation2], 193
    %v922 = vld [vmem:[%s921] ss:$2 sm:$0xff]
    %s923 = scalar_lea.vmem [#allocation2], 241
    %v924 = vld [vmem:[%s923] ss:$2 sm:$0xff]
    %s925 = scalar_lea.vmem [#allocation2], 289
    %v926 = vld [vmem:[%s925] ss:$2 sm:$0xff]
    %s927 = scalar_lea.vmem [#allocation2], 337
    %v928 = vld [vmem:[%s927] ss:$2 sm:$0xff]
    %s929 = scalar_lea.vmem [#allocation2], 433
    %v930 = vld [vmem:[%s929] ss:$2 sm:$0xff]
    %s931 = scalar_lea.vmem [#allocation2], 481
    %v932 = vld [vmem:[%s931] ss:$2 sm:$0xff]
    %s933 = scalar_lea.vmem [#allocation2], 529
    %v934 = vld [vmem:[%s933] ss:$2 sm:$0xff]
    %s935 = scalar_lea.vmem [#allocation2], 577
    %v936 = vld [vmem:[%s935] ss:$2 sm:$0xff]
    %s937 = scalar_lea.vmem [#allocation2], 625
    %v938 = vld [vmem:[%s937] ss:$2 sm:$0xff]
    %s939 = scalar_lea.vmem [#allocation2], 673
    %v940 = vld [vmem:[%s939] ss:$2 sm:$0xff]
    %s941 = scalar_lea.vmem [#allocation2], 721
    %v942 = vld [vmem:[%s941] ss:$2 sm:$0xff]
    %s943 = scalar_lea.vmem [#allocation2], 769
    %v944 = vld [vmem:[%s943] ss:$2 sm:$0xff]
    %v945 = vpack.c.bf16 %v916, %v914
    %v946 = vpack.c.bf16 %v920, %v918
    %v947 = vpack.c.bf16 %v924, %v922
    %v948 = vpack.c.bf16 %v928, %v926
    %v949 = vpack.c.bf16 %v932, %v930
    %v950 = vpack.c.bf16 %v936, %v934
    %v951 = vpack.c.bf16 %v940, %v938
    %v952 = vpack.c.bf16 %v944, %v942
    %s953 = scalar_lea.vmem [#allocation2], 2
    %v954 = vld [vmem:[%s953] ss:$2 sm:$0xff]
    %s955 = scalar_lea.vmem [#allocation2], 50
    %v956 = vld [vmem:[%s955] ss:$2 sm:$0xff]
    %s957 = scalar_lea.vmem [#allocation2], 98
    %v958 = vld [vmem:[%s957] ss:$2 sm:$0xff]
    %s959 = scalar_lea.vmem [#allocation2], 146
    %v960 = vld [vmem:[%s959] ss:$2 sm:$0xff]
    %s961 = scalar_lea.vmem [#allocation2], 194
    %v962 = vld [vmem:[%s961] ss:$2 sm:$0xff]
    %s963 = scalar_lea.vmem [#allocation2], 242
    %v964 = vld [vmem:[%s963] ss:$2 sm:$0xff]
    %s965 = scalar_lea.vmem [#allocation2], 290
    %v966 = vld [vmem:[%s965] ss:$2 sm:$0xff]
    %s967 = scalar_lea.vmem [#allocation2], 338
    %v968 = vld [vmem:[%s967] ss:$2 sm:$0xff]
    %s969 = scalar_lea.vmem [#allocation2], 434
    %v970 = vld [vmem:[%s969] ss:$2 sm:$0xff]
    %s971 = scalar_lea.vmem [#allocation2], 482
    %v972 = vld [vmem:[%s971] ss:$2 sm:$0xff]
    %s973 = scalar_lea.vmem [#allocation2], 530
    %v974 = vld [vmem:[%s973] ss:$2 sm:$0xff]
    %s975 = scalar_lea.vmem [#allocation2], 578
    %v976 = vld [vmem:[%s975] ss:$2 sm:$0xff]
    %s977 = scalar_lea.vmem [#allocation2], 626
    %v978 = vld [vmem:[%s977] ss:$2 sm:$0xff]
    %s979 = scalar_lea.vmem [#allocation2], 674
    %v980 = vld [vmem:[%s979] ss:$2 sm:$0xff]
    %s981 = scalar_lea.vmem [#allocation2], 722
    %v982 = vld [vmem:[%s981] ss:$2 sm:$0xff]
    %s983 = scalar_lea.vmem [#allocation2], 770
    %v984 = vld [vmem:[%s983] ss:$2 sm:$0xff]
    %v985 = vpack.c.bf16 %v956, %v954
    %v986 = vpack.c.bf16 %v960, %v958
    %v987 = vpack.c.bf16 %v964, %v962
    %v988 = vpack.c.bf16 %v968, %v966
    %v989 = vpack.c.bf16 %v972, %v970
    %v990 = vpack.c.bf16 %v976, %v974
    %v991 = vpack.c.bf16 %v980, %v978
    %v992 = vpack.c.bf16 %v984, %v982
    %v993 = vld [vmem:[%s809] ss:$2 sm:$0xff]
    %s994 = scalar_lea.vmem %s809, 48 [#allocation2]
    %v995 = vld [vmem:[%s994] ss:$2 sm:$0xff]
    %s996 = scalar_lea.vmem %s809, 96 [#allocation2]
    %v997 = vld [vmem:[%s996] ss:$2 sm:$0xff]
    %s998 = scalar_lea.vmem %s809, 144 [#allocation2]
    %v999 = vld [vmem:[%s998] ss:$2 sm:$0xff]
    %s1000 = scalar_lea.vmem %s809, 192 [#allocation2]
    %v1001 = vld [vmem:[%s1000] ss:$2 sm:$0xff]
    %s1002 = scalar_lea.vmem %s809, 240 [#allocation2]
    %v1003 = vld [vmem:[%s1002] ss:$2 sm:$0xff]
    %s1004 = scalar_lea.vmem %s809, 288 [#allocation2]
    %v1005 = vld [vmem:[%s1004] ss:$2 sm:$0xff]
    %s1006 = scalar_lea.vmem %s809, 336 [#allocation2]
    %v1007 = vld [vmem:[%s1006] ss:$2 sm:$0xff]
    %s1008 = scalar_lea.vmem %s809, 432 [#allocation2]
    %v1009 = vld [vmem:[%s1008] ss:$2 sm:$0xff]
    %s1010 = scalar_lea.vmem %s809, 480 [#allocation2]
    %v1011 = vld [vmem:[%s1010] ss:$2 sm:$0xff]
    %s1012 = scalar_lea.vmem %s809, 528 [#allocation2]
    %v1013 = vld [vmem:[%s1012] ss:$2 sm:$0xff]
    %s1014 = scalar_lea.vmem %s809, 576 [#allocation2]
    %v1015 = vld [vmem:[%s1014] ss:$2 sm:$0xff]
    %s1016 = scalar_lea.vmem %s809, 624 [#allocation2]
    %v1017 = vld [vmem:[%s1016] ss:$2 sm:$0xff]
    %s1018 = scalar_lea.vmem %s809, 672 [#allocation2]
    %v1019 = vld [vmem:[%s1018] ss:$2 sm:$0xff]
    %s1020 = scalar_lea.vmem %s809, 720 [#allocation2]
    %v1021 = vld [vmem:[%s1020] ss:$2 sm:$0xff]
    %s1022 = scalar_lea.vmem %s809, 768 [#allocation2]
    %v1023 = vld [vmem:[%s1022] ss:$2 sm:$0xff]
    %v1024 = vpack.c.bf16 %v995, %v993
    %v1025 = vpack.c.bf16 %v999, %v997
    %v1026 = vpack.c.bf16 %v1003, %v1001
    %v1027 = vpack.c.bf16 %v1007, %v1005
    %v1028 = vpack.c.bf16 %v1011, %v1009
    %v1029 = vpack.c.bf16 %v1015, %v1013
    %v1030 = vpack.c.bf16 %v1019, %v1017
    %v1031 = vpack.c.bf16 %v1023, %v1021
    %s1032 = scalar_lea.vmem %s809, 1 [#allocation2]
    %v1033 = vld [vmem:[%s1032] ss:$2 sm:$0xff]
    %s1034 = scalar_lea.vmem %s809, 49 [#allocation2]
    %v1035 = vld [vmem:[%s1034] ss:$2 sm:$0xff]
    %s1036 = scalar_lea.vmem %s809, 97 [#allocation2]
    %v1037 = vld [vmem:[%s1036] ss:$2 sm:$0xff]
    %s1038 = scalar_lea.vmem %s809, 145 [#allocation2]
    %v1039 = vld [vmem:[%s1038] ss:$2 sm:$0xff]
    %s1040 = scalar_lea.vmem %s809, 193 [#allocation2]
    %v1041 = vld [vmem:[%s1040] ss:$2 sm:$0xff]
    %s1042 = scalar_lea.vmem %s809, 241 [#allocation2]
    %v1043 = vld [vmem:[%s1042] ss:$2 sm:$0xff]
    %s1044 = scalar_lea.vmem %s809, 289 [#allocation2]
    %v1045 = vld [vmem:[%s1044] ss:$2 sm:$0xff]
    %s1046 = scalar_lea.vmem %s809, 337 [#allocation2]
    %v1047 = vld [vmem:[%s1046] ss:$2 sm:$0xff]
    %s1048 = scalar_lea.vmem %s809, 433 [#allocation2]
    %v1049 = vld [vmem:[%s1048] ss:$2 sm:$0xff]
    %s1050 = scalar_lea.vmem %s809, 481 [#allocation2]
    %v1051 = vld [vmem:[%s1050] ss:$2 sm:$0xff]
    %s1052 = scalar_lea.vmem %s809, 529 [#allocation2]
    %v1053 = vld [vmem:[%s1052] ss:$2 sm:$0xff]
    %s1054 = scalar_lea.vmem %s809, 577 [#allocation2]
    %v1055 = vld [vmem:[%s1054] ss:$2 sm:$0xff]
    %s1056 = scalar_lea.vmem %s809, 625 [#allocation2]
    %v1057 = vld [vmem:[%s1056] ss:$2 sm:$0xff]
    %s1058 = scalar_lea.vmem %s809, 673 [#allocation2]
    %v1059 = vld [vmem:[%s1058] ss:$2 sm:$0xff]
    %s1060 = scalar_lea.vmem %s809, 721 [#allocation2]
    %v1061 = vld [vmem:[%s1060] ss:$2 sm:$0xff]
    %s1062 = scalar_lea.vmem %s809, 769 [#allocation2]
    %v1063 = vld [vmem:[%s1062] ss:$2 sm:$0xff]
    %v1064 = vpack.c.bf16 %v1035, %v1033
    %v1065 = vpack.c.bf16 %v1039, %v1037
    %v1066 = vpack.c.bf16 %v1043, %v1041
    %v1067 = vpack.c.bf16 %v1047, %v1045
    %v1068 = vpack.c.bf16 %v1051, %v1049
    %v1069 = vpack.c.bf16 %v1055, %v1053
    %v1070 = vpack.c.bf16 %v1059, %v1057
    %v1071 = vpack.c.bf16 %v1063, %v1061
    %s1072 = scalar_lea.vmem %s809, 2 [#allocation2]
    %v1073 = vld [vmem:[%s1072] ss:$2 sm:$0xff]
    %s1074 = scalar_lea.vmem %s809, 50 [#allocation2]
    %v1075 = vld [vmem:[%s1074] ss:$2 sm:$0xff]
    %s1076 = scalar_lea.vmem %s809, 98 [#allocation2]
    %v1077 = vld [vmem:[%s1076] ss:$2 sm:$0xff]
    %s1078 = scalar_lea.vmem %s809, 146 [#allocation2]
    %v1079 = vld [vmem:[%s1078] ss:$2 sm:$0xff]
    %s1080 = scalar_lea.vmem %s809, 194 [#allocation2]
    %v1081 = vld [vmem:[%s1080] ss:$2 sm:$0xff]
    %s1082 = scalar_lea.vmem %s809, 242 [#allocation2]
    %v1083 = vld [vmem:[%s1082] ss:$2 sm:$0xff]
    %s1084 = scalar_lea.vmem %s809, 290 [#allocation2]
    %v1085 = vld [vmem:[%s1084] ss:$2 sm:$0xff]
    %s1086 = scalar_lea.vmem %s809, 338 [#allocation2]
    %v1087 = vld [vmem:[%s1086] ss:$2 sm:$0xff]
    %s1088 = scalar_lea.vmem %s809, 434 [#allocation2]
    %v1089 = vld [vmem:[%s1088] ss:$2 sm:$0xff]
    %s1090 = scalar_lea.vmem %s809, 482 [#allocation2]
    %v1091 = vld [vmem:[%s1090] ss:$2 sm:$0xff]
    %s1092 = scalar_lea.vmem %s809, 530 [#allocation2]
    %v1093 = vld [vmem:[%s1092] ss:$2 sm:$0xff]
    %s1094 = scalar_lea.vmem %s809, 578 [#allocation2]
    %v1095 = vld [vmem:[%s1094] ss:$2 sm:$0xff]
    %s1096 = scalar_lea.vmem %s809, 626 [#allocation2]
    %v1097 = vld [vmem:[%s1096] ss:$2 sm:$0xff]
    %s1098 = scalar_lea.vmem %s809, 674 [#allocation2]
    %v1099 = vld [vmem:[%s1098] ss:$2 sm:$0xff]
    %s1100 = scalar_lea.vmem %s809, 722 [#allocation2]
    %v1101 = vld [vmem:[%s1100] ss:$2 sm:$0xff]
    %s1102 = scalar_lea.vmem %s809, 770 [#allocation2]
    %v1103 = vld [vmem:[%s1102] ss:$2 sm:$0xff]
    %v1104 = vpack.c.bf16 %v1075, %v1073
    %v1105 = vpack.c.bf16 %v1079, %v1077
    %v1106 = vpack.c.bf16 %v1083, %v1081
    %v1107 = vpack.c.bf16 %v1087, %v1085
    %v1108 = vpack.c.bf16 %v1091, %v1089
    %v1109 = vpack.c.bf16 %v1095, %v1093
    %v1110 = vpack.c.bf16 %v1099, %v1097
    %v1111 = vpack.c.bf16 %v1103, %v1101
    %s1112 = scalar_lea.vmem [#allocation2], 48
    %v1113 = vld [vmem:[%s1112] ss:$2 sm:$0xff]
    %s1114 = scalar_lea.vmem %s1112, 48 [#allocation2]
    %v1115 = vld [vmem:[%s1114] ss:$2 sm:$0xff]
    %s1116 = scalar_lea.vmem %s1112, 96 [#allocation2]
    %v1117 = vld [vmem:[%s1116] ss:$2 sm:$0xff]
    %s1118 = scalar_lea.vmem %s1112, 144 [#allocation2]
    %v1119 = vld [vmem:[%s1118] ss:$2 sm:$0xff]
    %s1120 = scalar_lea.vmem %s1112, 192 [#allocation2]
    %v1121 = vld [vmem:[%s1120] ss:$2 sm:$0xff]
    %s1122 = scalar_lea.vmem %s1112, 240 [#allocation2]
    %v1123 = vld [vmem:[%s1122] ss:$2 sm:$0xff]
    %s1124 = scalar_lea.vmem %s1112, 288 [#allocation2]
    %v1125 = vld [vmem:[%s1124] ss:$2 sm:$0xff]
    %s1126 = scalar_lea.vmem %s1112, 336 [#allocation2]
    %v1127 = vld [vmem:[%s1126] ss:$2 sm:$0xff]
    %s1128 = scalar_lea.vmem %s1112, 432 [#allocation2]
    %v1129 = vld [vmem:[%s1128] ss:$2 sm:$0xff]
    %s1130 = scalar_lea.vmem %s1112, 480 [#allocation2]
    %v1131 = vld [vmem:[%s1130] ss:$2 sm:$0xff]
    %s1132 = scalar_lea.vmem %s1112, 528 [#allocation2]
    %v1133 = vld [vmem:[%s1132] ss:$2 sm:$0xff]
    %s1134 = scalar_lea.vmem %s1112, 576 [#allocation2]
    %v1135 = vld [vmem:[%s1134] ss:$2 sm:$0xff]
    %s1136 = scalar_lea.vmem %s1112, 624 [#allocation2]
    %v1137 = vld [vmem:[%s1136] ss:$2 sm:$0xff]
    %s1138 = scalar_lea.vmem %s1112, 672 [#allocation2]
    %v1139 = vld [vmem:[%s1138] ss:$2 sm:$0xff]
    %s1140 = scalar_lea.vmem %s1112, 720 [#allocation2]
    %v1141 = vld [vmem:[%s1140] ss:$2 sm:$0xff]
    %s1142 = scalar_lea.vmem %s1112, 768 [#allocation2]
    %v1143 = vld [vmem:[%s1142] ss:$2 sm:$0xff]
    %v1144 = vpack.c.bf16 %v1115, %v1113
    %v1145 = vpack.c.bf16 %v1119, %v1117
    %v1146 = vpack.c.bf16 %v1123, %v1121
    %v1147 = vpack.c.bf16 %v1127, %v1125
    %v1148 = vpack.c.bf16 %v1131, %v1129
    %v1149 = vpack.c.bf16 %v1135, %v1133
    %v1150 = vpack.c.bf16 %v1139, %v1137
    %v1151 = vpack.c.bf16 %v1143, %v1141
    %s1152 = scalar_lea.vmem %s1112, 1 [#allocation2]
    %v1153 = vld [vmem:[%s1152] ss:$2 sm:$0xff]
    %s1154 = scalar_lea.vmem %s1112, 49 [#allocation2]
    %v1155 = vld [vmem:[%s1154] ss:$2 sm:$0xff]
    %s1156 = scalar_lea.vmem %s1112, 97 [#allocation2]
    %v1157 = vld [vmem:[%s1156] ss:$2 sm:$0xff]
    %s1158 = scalar_lea.vmem %s1112, 145 [#allocation2]
    %v1159 = vld [vmem:[%s1158] ss:$2 sm:$0xff]
    %s1160 = scalar_lea.vmem %s1112, 193 [#allocation2]
    %v1161 = vld [vmem:[%s1160] ss:$2 sm:$0xff]
    %s1162 = scalar_lea.vmem %s1112, 241 [#allocation2]
    %v1163 = vld [vmem:[%s1162] ss:$2 sm:$0xff]
    %s1164 = scalar_lea.vmem %s1112, 289 [#allocation2]
    %v1165 = vld [vmem:[%s1164] ss:$2 sm:$0xff]
    %s1166 = scalar_lea.vmem %s1112, 337 [#allocation2]
    %v1167 = vld [vmem:[%s1166] ss:$2 sm:$0xff]
    %s1168 = scalar_lea.vmem %s1112, 433 [#allocation2]
    %v1169 = vld [vmem:[%s1168] ss:$2 sm:$0xff]
    %s1170 = scalar_lea.vmem %s1112, 481 [#allocation2]
    %v1171 = vld [vmem:[%s1170] ss:$2 sm:$0xff]
    %s1172 = scalar_lea.vmem %s1112, 529 [#allocation2]
    %v1173 = vld [vmem:[%s1172] ss:$2 sm:$0xff]
    %s1174 = scalar_lea.vmem %s1112, 577 [#allocation2]
    %v1175 = vld [vmem:[%s1174] ss:$2 sm:$0xff]
    %s1176 = scalar_lea.vmem %s1112, 625 [#allocation2]
    %v1177 = vld [vmem:[%s1176] ss:$2 sm:$0xff]
    %s1178 = scalar_lea.vmem %s1112, 673 [#allocation2]
    %v1179 = vld [vmem:[%s1178] ss:$2 sm:$0xff]
    %s1180 = scalar_lea.vmem %s1112, 721 [#allocation2]
    %v1181 = vld [vmem:[%s1180] ss:$2 sm:$0xff]
    %s1182 = scalar_lea.vmem %s1112, 769 [#allocation2]
    %v1183 = vld [vmem:[%s1182] ss:$2 sm:$0xff]
    %v1184 = vpack.c.bf16 %v1155, %v1153
    %v1185 = vpack.c.bf16 %v1159, %v1157
    %v1186 = vpack.c.bf16 %v1163, %v1161
    %v1187 = vpack.c.bf16 %v1167, %v1165
    %v1188 = vpack.c.bf16 %v1171, %v1169
    %v1189 = vpack.c.bf16 %v1175, %v1173
    %v1190 = vpack.c.bf16 %v1179, %v1177
    %v1191 = vpack.c.bf16 %v1183, %v1181
    %s1192 = scalar_lea.vmem %s1112, 2 [#allocation2]
    %v1193 = vld [vmem:[%s1192] ss:$2 sm:$0xff]
    %s1194 = scalar_lea.vmem %s1112, 50 [#allocation2]
    %v1195 = vld [vmem:[%s1194] ss:$2 sm:$0xff]
    %s1196 = scalar_lea.vmem %s1112, 98 [#allocation2]
    %v1197 = vld [vmem:[%s1196] ss:$2 sm:$0xff]
    %s1198 = scalar_lea.vmem %s1112, 146 [#allocation2]
    %v1199 = vld [vmem:[%s1198] ss:$2 sm:$0xff]
    %s1200 = scalar_lea.vmem %s1112, 194 [#allocation2]
    %v1201 = vld [vmem:[%s1200] ss:$2 sm:$0xff]
    %s1202 = scalar_lea.vmem %s1112, 242 [#allocation2]
    %v1203 = vld [vmem:[%s1202] ss:$2 sm:$0xff]
    %s1204 = scalar_lea.vmem %s1112, 290 [#allocation2]
    %v1205 = vld [vmem:[%s1204] ss:$2 sm:$0xff]
    %s1206 = scalar_lea.vmem %s1112, 338 [#allocation2]
    %v1207 = vld [vmem:[%s1206] ss:$2 sm:$0xff]
    %s1208 = scalar_lea.vmem %s1112, 434 [#allocation2]
    %v1209 = vld [vmem:[%s1208] ss:$2 sm:$0xff]
    %s1210 = scalar_lea.vmem %s1112, 482 [#allocation2]
    %v1211 = vld [vmem:[%s1210] ss:$2 sm:$0xff]
    %s1212 = scalar_lea.vmem %s1112, 530 [#allocation2]
    %v1213 = vld [vmem:[%s1212] ss:$2 sm:$0xff]
    %s1214 = scalar_lea.vmem %s1112, 578 [#allocation2]
    %v1215 = vld [vmem:[%s1214] ss:$2 sm:$0xff]
    %s1216 = scalar_lea.vmem %s1112, 626 [#allocation2]
    %v1217 = vld [vmem:[%s1216] ss:$2 sm:$0xff]
    %s1218 = scalar_lea.vmem %s1112, 674 [#allocation2]
    %v1219 = vld [vmem:[%s1218] ss:$2 sm:$0xff]
    %s1220 = scalar_lea.vmem %s1112, 722 [#allocation2]
    %v1221 = vld [vmem:[%s1220] ss:$2 sm:$0xff]
    %s1222 = scalar_lea.vmem %s1112, 770 [#allocation2]
    %v1223 = vld [vmem:[%s1222] ss:$2 sm:$0xff]
    %v1224 = vpack.c.bf16 %v1195, %v1193
    %v1225 = vpack.c.bf16 %v1199, %v1197
    %v1226 = vpack.c.bf16 %v1203, %v1201
    %v1227 = vpack.c.bf16 %v1207, %v1205
    %v1228 = vpack.c.bf16 %v1211, %v1209
    %v1229 = vpack.c.bf16 %v1215, %v1213
    %v1230 = vpack.c.bf16 %v1219, %v1217
    %v1231 = vpack.c.bf16 %v1223, %v1221
    %1240 = vrot.lane.b32.xlu0 %v945, 4
    %v1241 = vpop.permute.xlu0 %1240
    %1242 = vrot.lane.b32.xlu0 %v946, 4
    %v1243 = vpop.permute.xlu0 %1242
    %1244 = vrot.lane.b32.xlu0 %v947, 4
    %v1245 = vpop.permute.xlu0 %1244
    %1246 = vrot.lane.b32.xlu0 %v948, 4
    %v1247 = vpop.permute.xlu0 %1246
    %1248 = vrot.lane.b32.xlu0 %v949, 4
    %v1249 = vpop.permute.xlu0 %1248
    %1250 = vrot.lane.b32.xlu0 %v950, 4
    %v1251 = vpop.permute.xlu0 %1250
    %1252 = vrot.lane.b32.xlu0 %v951, 4
    %v1253 = vpop.permute.xlu0 %1252
    %1254 = vrot.lane.b32.xlu0 %v952, 4
    %v1255 = vpop.permute.xlu0 %1254
    %1264 = vrot.lane.b32.xlu0 %v985, 8
    %v1265 = vpop.permute.xlu0 %1264
    %1266 = vrot.lane.b32.xlu0 %v986, 8
    %v1267 = vpop.permute.xlu0 %1266
    %1268 = vrot.lane.b32.xlu0 %v987, 8
    %v1269 = vpop.permute.xlu0 %1268
    %1270 = vrot.lane.b32.xlu0 %v988, 8
    %v1271 = vpop.permute.xlu0 %1270
    %1272 = vrot.lane.b32.xlu0 %v989, 8
    %v1273 = vpop.permute.xlu0 %1272
    %1274 = vrot.lane.b32.xlu0 %v990, 8
    %v1275 = vpop.permute.xlu0 %1274
    %1276 = vrot.lane.b32.xlu0 %v991, 8
    %v1277 = vpop.permute.xlu0 %1276
    %1278 = vrot.lane.b32.xlu0 %v992, 8
    %v1279 = vpop.permute.xlu0 %1278
    %1288 = vrot.lane.b32.xlu0 %v1024, 12
    %v1289 = vpop.permute.xlu0 %1288
    %1290 = vrot.lane.b32.xlu0 %v1025, 12
    %v1291 = vpop.permute.xlu0 %1290
    %1292 = vrot.lane.b32.xlu0 %v1026, 12
    %v1293 = vpop.permute.xlu0 %1292
    %1294 = vrot.lane.b32.xlu0 %v1027, 12
    %v1295 = vpop.permute.xlu0 %1294
    %1296 = vrot.lane.b32.xlu0 %v1028, 12
    %v1297 = vpop.permute.xlu0 %1296
    %1298 = vrot.lane.b32.xlu0 %v1029, 12
    %v1299 = vpop.permute.xlu0 %1298
    %1300 = vrot.lane.b32.xlu0 %v1030, 12
    %v1301 = vpop.permute.xlu0 %1300
    %1302 = vrot.lane.b32.xlu0 %v1031, 12
    %v1303 = vpop.permute.xlu0 %1302
    %1312 = vrot.lane.b32.xlu0 %v1064, 16
    %v1313 = vpop.permute.xlu0 %1312
    %1314 = vrot.lane.b32.xlu0 %v1065, 16
    %v1315 = vpop.permute.xlu0 %1314
    %1316 = vrot.lane.b32.xlu0 %v1066, 16
    %v1317 = vpop.permute.xlu0 %1316
    %1318 = vrot.lane.b32.xlu0 %v1067, 16
    %v1319 = vpop.permute.xlu0 %1318
    %1320 = vrot.lane.b32.xlu0 %v1068, 16
    %v1321 = vpop.permute.xlu0 %1320
    %1322 = vrot.lane.b32.xlu0 %v1069, 16
    %v1323 = vpop.permute.xlu0 %1322
    %1324 = vrot.lane.b32.xlu0 %v1070, 16
    %v1325 = vpop.permute.xlu0 %1324
    %1326 = vrot.lane.b32.xlu0 %v1071, 16
    %v1327 = vpop.permute.xlu0 %1326
    %1336 = vrot.lane.b32.xlu0 %v1104, 20
    %v1337 = vpop.permute.xlu0 %1336
    %1338 = vrot.lane.b32.xlu0 %v1105, 20
    %v1339 = vpop.permute.xlu0 %1338
    %1340 = vrot.lane.b32.xlu0 %v1106, 20
    %v1341 = vpop.permute.xlu0 %1340
    %1342 = vrot.lane.b32.xlu0 %v1107, 20
    %v1343 = vpop.permute.xlu0 %1342
    %1344 = vrot.lane.b32.xlu0 %v1108, 20
    %v1345 = vpop.permute.xlu0 %1344
    %1346 = vrot.lane.b32.xlu0 %v1109, 20
    %v1347 = vpop.permute.xlu0 %1346
    %1348 = vrot.lane.b32.xlu0 %v1110, 20
    %v1349 = vpop.permute.xlu0 %1348
    %1350 = vrot.lane.b32.xlu0 %v1111, 20
    %v1351 = vpop.permute.xlu0 %1350
    %1360 = vrot.lane.b32.xlu0 %v1144, 24
    %v1361 = vpop.permute.xlu0 %1360
    %1362 = vrot.lane.b32.xlu0 %v1145, 24
    %v1363 = vpop.permute.xlu0 %1362
    %1364 = vrot.lane.b32.xlu0 %v1146, 24
    %v1365 = vpop.permute.xlu0 %1364
    %1366 = vrot.lane.b32.xlu0 %v1147, 24
    %v1367 = vpop.permute.xlu0 %1366
    %1368 = vrot.lane.b32.xlu0 %v1148, 24
    %v1369 = vpop.permute.xlu0 %1368
    %1370 = vrot.lane.b32.xlu0 %v1149, 24
    %v1371 = vpop.permute.xlu0 %1370
    %1372 = vrot.lane.b32.xlu0 %v1150, 24
    %v1373 = vpop.permute.xlu0 %1372
    %1374 = vrot.lane.b32.xlu0 %v1151, 24
    %v1375 = vpop.permute.xlu0 %1374
    %1384 = vrot.lane.b32.xlu0 %v1184, 28
    %v1385 = vpop.permute.xlu0 %1384
    %1386 = vrot.lane.b32.xlu0 %v1185, 28
    %v1387 = vpop.permute.xlu0 %1386
    %1388 = vrot.lane.b32.xlu0 %v1186, 28
    %v1389 = vpop.permute.xlu0 %1388
    %1390 = vrot.lane.b32.xlu0 %v1187, 28
    %v1391 = vpop.permute.xlu0 %1390
    %1392 = vrot.lane.b32.xlu0 %v1188, 28
    %v1393 = vpop.permute.xlu0 %1392
    %1394 = vrot.lane.b32.xlu0 %v1189, 28
    %v1395 = vpop.permute.xlu0 %1394
    %1396 = vrot.lane.b32.xlu0 %v1190, 28
    %v1397 = vpop.permute.xlu0 %1396
    %1398 = vrot.lane.b32.xlu0 %v1191, 28
    %v1399 = vpop.permute.xlu0 %1398
    %1408 = vrot.lane.b32.xlu0 %v1224, 32
    %v1409 = vpop.permute.xlu0 %1408
    %1410 = vrot.lane.b32.xlu0 %v1225, 32
    %v1411 = vpop.permute.xlu0 %1410
    %1412 = vrot.lane.b32.xlu0 %v1226, 32
    %v1413 = vpop.permute.xlu0 %1412
    %1414 = vrot.lane.b32.xlu0 %v1227, 32
    %v1415 = vpop.permute.xlu0 %1414
    %1416 = vrot.lane.b32.xlu0 %v1228, 32
    %v1417 = vpop.permute.xlu0 %1416
    %1418 = vrot.lane.b32.xlu0 %v1229, 32
    %v1419 = vpop.permute.xlu0 %1418
    %1420 = vrot.lane.b32.xlu0 %v1230, 32
    %v1421 = vpop.permute.xlu0 %1420
    %1422 = vrot.lane.b32.xlu0 %v1231, 32
    %v1423 = vpop.permute.xlu0 %1422
    %v1426 = vsel %vm269, %v905, %v1241
    %v1429 = vsel %vm269, %v906, %v1243
    %v1432 = vsel %vm269, %v907, %v1245
    %v1435 = vsel %vm269, %v908, %v1247
    %v1438 = vsel %vm269, %v909, %v1249
    %v1441 = vsel %vm269, %v910, %v1251
    %v1444 = vsel %vm269, %v911, %v1253
    %v1447 = vsel %vm269, %v912, %v1255
    %vm1448 = vcmask 64512
    %v1450 = vsel %vm1448, %v1426, %v1265
    %v1452 = vsel %vm1448, %v1429, %v1267
    %v1454 = vsel %vm1448, %v1432, %v1269
    %v1456 = vsel %vm1448, %v1435, %v1271
    %v1458 = vsel %vm1448, %v1438, %v1273
    %v1460 = vsel %vm1448, %v1441, %v1275
    %v1462 = vsel %vm1448, %v1444, %v1277
    %v1464 = vsel %vm1448, %v1447, %v1279
    %vm1465 = vcmask 97280
    %v1467 = vsel %vm1465, %v1450, %v1289
    %v1469 = vsel %vm1465, %v1452, %v1291
    %v1471 = vsel %vm1465, %v1454, %v1293
    %v1473 = vsel %vm1465, %v1456, %v1295
    %v1475 = vsel %vm1465, %v1458, %v1297
    %v1477 = vsel %vm1465, %v1460, %v1299
    %v1479 = vsel %vm1465, %v1462, %v1301
    %v1481 = vsel %vm1465, %v1464, %v1303
    %vm1482 = vcmask 130048
    %v1484 = vsel %vm1482, %v1467, %v1313
    %v1486 = vsel %vm1482, %v1469, %v1315
    %v1488 = vsel %vm1482, %v1471, %v1317
    %v1490 = vsel %vm1482, %v1473, %v1319
    %v1492 = vsel %vm1482, %v1475, %v1321
    %v1494 = vsel %vm1482, %v1477, %v1323
    %v1496 = vsel %vm1482, %v1479, %v1325
    %v1498 = vsel %vm1482, %v1481, %v1327
    %vm1499 = vcmask 162816
    %v1501 = vsel %vm1499, %v1484, %v1337
    %v1503 = vsel %vm1499, %v1486, %v1339
    %v1505 = vsel %vm1499, %v1488, %v1341
    %v1507 = vsel %vm1499, %v1490, %v1343
    %v1509 = vsel %vm1499, %v1492, %v1345
    %v1511 = vsel %vm1499, %v1494, %v1347
    %v1513 = vsel %vm1499, %v1496, %v1349
    %v1515 = vsel %vm1499, %v1498, %v1351
    %vm1516 = vcmask 195584
    %v1518 = vsel %vm1516, %v1501, %v1361
    %v1520 = vsel %vm1516, %v1503, %v1363
    %v1522 = vsel %vm1516, %v1505, %v1365
    %v1524 = vsel %vm1516, %v1507, %v1367
    %v1526 = vsel %vm1516, %v1509, %v1369
    %v1528 = vsel %vm1516, %v1511, %v1371
    %v1530 = vsel %vm1516, %v1513, %v1373
    %v1532 = vsel %vm1516, %v1515, %v1375
    %vm1533 = vcmask 228352
    %v1535 = vsel %vm1533, %v1518, %v1385
    %v1537 = vsel %vm1533, %v1520, %v1387
    %v1539 = vsel %vm1533, %v1522, %v1389
    %v1541 = vsel %vm1533, %v1524, %v1391
    %v1543 = vsel %vm1533, %v1526, %v1393
    %v1545 = vsel %vm1533, %v1528, %v1395
    %v1547 = vsel %vm1533, %v1530, %v1397
    %v1549 = vsel %vm1533, %v1532, %v1399
    %vm1550 = vcmask 261120
    %v1552 = vsel %vm1550, %v1535, %v1409
    %v1554 = vsel %vm1550, %v1537, %v1411
    %v1556 = vsel %vm1550, %v1539, %v1413
    %v1558 = vsel %vm1550, %v1541, %v1415
    %v1560 = vsel %vm1550, %v1543, %v1417
    %v1562 = vsel %vm1550, %v1545, %v1419
    %v1564 = vsel %vm1550, %v1547, %v1421
    %v1566 = vsel %vm1550, %v1549, %v1423
    %v1567 = vld [vmem:[%s4] sm:$0xf]
    %v1568 = vld [vmem:[%s4 + $0x4] sm:$0xf]
    %v1569 = vld [vmem:[%s4 + $0x8] sm:$0xf]
    %v1570 = vld [vmem:[%s4 + $0xc] sm:$0xf]
    %v1571 = vld [vmem:[%s4 + $0x10] sm:$0x3]
    %v1572 = vld [vmem:[%s5] sm:$0x1]
    %v1574 = vlaneseq
    %v1575 = vshrl.u32 %v1574, 7
    %v1576 = vsub.s32 0, %v1575
    %v1577 = vrot.slane %v1572, %v1576
    %v1584 = vunpack.c.l.b16 %v1567
    %v1585 = vunpack.c.l.b16 %v1568
    %v1586 = vunpack.c.l.b16 %v1569
    %v1587 = vunpack.c.l.b16 %v1570
    %v1588 = vunpack.c.l.b16 %v1571
    %v1589 = vpack.c.b16 %v1585, %v1584
    %v1590 = vpack.c.b16 %v1587, %v1586
    %v1591 = vpack.c.b16 %v1588, %v1588
    %vm1594 = vcmask 293888
    %v1595 = vsel %vm1594, %v1552, 0
    %v1597 = vsel %vm1594, %v1554, 0
    %v1599 = vsel %vm1594, %v1556, 0
    %v1601 = vsel %vm1594, %v1558, 0
    %v1603 = vsel %vm1594, %v1560, 0
    %v1605 = vsel %vm1594, %v1562, 0
    %v1607 = vsel %vm1594, %v1564, 0
    %v1609 = vsel %vm1594, %v1566, 0
    %v1612 = vsel %vm366, %v1591, 0
    %1614 = vmatprep.subr.bf16.mxu0 0
    %1615 = vmatpush1.bf16.msra.mxu0 %v1589
    %1616 = vmatprep.subr.bf16.mxu0 0
    %1617 = vmatpush1.bf16.msra.mxu0 %v1590
    %1618 = vmatprep.subr.bf16.mxu0 0
    %1619 = vmatpush1.bf16.msra.mxu0 %v1612
    %1620 = vmatprep.subr.bf16.mxu0 0
    %1621 = vmatpush1.bf16.msra.mxu0 0
    %1622 = vmatprep.subr.bf16.mxu0 0
    %1623 = vmatpush1.bf16.msra.mxu0 0
    %1624 = vmatprep.subr.bf16.mxu0 0
    %1625 = vmatpush1.bf16.msra.mxu0 0
    %1626 = vmatprep.subr.bf16.mxu0 0
    %1627 = vmatpush1.bf16.msra.mxu0 0
    %1628 = vmatprep.subr.bf16.mxu0 0
    %1629 = vmatpush1.bf16.msra.mxu0 0
    %1630 = vmatprep.subr.bf16.mxu0 0
    %1631 = vmatpush1.bf16.msra.mxu0 0
    %1632 = vmatprep.subr.bf16.mxu0 0
    %1633 = vmatpush1.bf16.msra.mxu0 0
    %1634 = vmatprep.subr.bf16.mxu0 0
    %1635 = vmatpush1.bf16.msra.mxu0 0
    %1636 = vmatprep.subr.bf16.mxu0 0
    %1637 = vmatpush1.bf16.msra.mxu0 0
    %1638 = vmatprep.subr.bf16.mxu0 0
    %1639 = vmatpush1.bf16.msra.mxu0 0
    %1640 = vmatprep.subr.bf16.mxu0 0
    %1641 = vmatpush1.bf16.msra.mxu0 0
    %1642 = vmatprep.subr.bf16.mxu0 0
    %1643 = vmatpush1.bf16.msra.mxu0 0
    %1644 = vmatprep.subr.bf16.mxu0 0
    %1645 = vmatpush1.bf16.msra.mxu0 0
    %1646 = vmatprep.mubr.bf16.mxu0 0
    %1647 = vmatmul.mubr.bf16.gmra.mrb[0].mxu0 %v1595
    %v1648 = vpop.f32.mrb[0].mxu0
    %v1649 = vadd.f32 %v1577, %v1648
    %v1650 = vpop.f32.mrb[0].mxu0
    %v1651 = vpop.f32.mrb[0].mxu0
    %v1652 = vadd.f32 %v1577, %v1651
    %v1653 = vpop.f32.mrb[0].mxu0
    %1654 = vmatprep.mubr.bf16.mxu0 0
    %1655 = vmatmul.mubr.bf16.gmra.mrb[0].mxu0 %v1597
    %v1656 = vpop.f32.mrb[0].mxu0
    %v1657 = vadd.f32 %v1577, %v1656
    %v1658 = vpop.f32.mrb[0].mxu0
    %v1659 = vpop.f32.mrb[0].mxu0
    %v1660 = vadd.f32 %v1577, %v1659
    %v1661 = vpop.f32.mrb[0].mxu0
    %1662 = vmatprep.mubr.bf16.mxu0 0
    %1663 = vmatmul.mubr.bf16.gmra.mrb[0].mxu0 %v1599
    %v1664 = vpop.f32.mrb[0].mxu0
    %v1665 = vadd.f32 %v1577, %v1664
    %v1666 = vpop.f32.mrb[0].mxu0
    %v1667 = vpop.f32.mrb[0].mxu0
    %v1668 = vadd.f32 %v1577, %v1667
    %v1669 = vpop.f32.mrb[0].mxu0
    %1670 = vmatprep.mubr.bf16.mxu0 0
    %1671 = vmatmul.mubr.bf16.gmra.mrb[0].mxu0 %v1601
    %v1672 = vpop.f32.mrb[0].mxu0
    %v1673 = vadd.f32 %v1577, %v1672
    %v1674 = vpop.f32.mrb[0].mxu0
    %v1675 = vpop.f32.mrb[0].mxu0
    %v1676 = vadd.f32 %v1577, %v1675
    %v1677 = vpop.f32.mrb[0].mxu0
    %1678 = vmatprep.mubr.bf16.mxu0 0
    %1679 = vmatmul.mubr.bf16.gmra.mrb[0].mxu0 %v1603
    %v1680 = vpop.f32.mrb[0].mxu0
    %v1681 = vadd.f32 %v1577, %v1680
    %v1682 = vpop.f32.mrb[0].mxu0
    %v1683 = vpop.f32.mrb[0].mxu0
    %v1684 = vadd.f32 %v1577, %v1683
    %v1685 = vpop.f32.mrb[0].mxu0
    %1686 = vmatprep.mubr.bf16.mxu0 0
    %1687 = vmatmul.mubr.bf16.gmra.mrb[0].mxu0 %v1605
    %v1688 = vpop.f32.mrb[0].mxu0
    %v1689 = vadd.f32 %v1577, %v1688
    %v1690 = vpop.f32.mrb[0].mxu0
    %v1691 = vpop.f32.mrb[0].mxu0
    %v1692 = vadd.f32 %v1577, %v1691
    %v1693 = vpop.f32.mrb[0].mxu0
    %1694 = vmatprep.mubr.bf16.mxu0 0
    %1695 = vmatmul.mubr.bf16.gmra.mrb[0].mxu0 %v1607
    %v1696 = vpop.f32.mrb[0].mxu0
    %v1697 = vadd.f32 %v1577, %v1696
    %v1698 = vpop.f32.mrb[0].mxu0
    %v1699 = vpop.f32.mrb[0].mxu0
    %v1700 = vadd.f32 %v1577, %v1699
    %v1701 = vpop.f32.mrb[0].mxu0
    %1702 = vmatprep.mubr.bf16.mxu0 0
    %1703 = vmatmul.mubr.bf16.gmra.mrb[0].mxu0 %v1609
    %v1704 = vpop.f32.mrb[0].mxu0
    %v1705 = vadd.f32 %v1577, %v1704
    %v1706 = vpop.f32.mrb[0].mxu0
    %v1707 = vpop.f32.mrb[0].mxu0
    %v1708 = vadd.f32 %v1577, %v1707
    %v1709 = vpop.f32.mrb[0].mxu0
    %1710 = vdwg.mxu0
    %v1711 = vmax.f32 %v1649, 0.0
    %v1712 = vmax.f32 %v1652, 0.0
    %v1713 = vmax.f32 %v1657, 0.0
    %v1714 = vmax.f32 %v1660, 0.0
    %v1715 = vmax.f32 %v1665, 0.0
    %v1716 = vmax.f32 %v1668, 0.0
    %v1717 = vmax.f32 %v1673, 0.0
    %v1718 = vmax.f32 %v1676, 0.0
    %v1719 = vmax.f32 %v1681, 0.0
    %v1720 = vmax.f32 %v1684, 0.0
    %v1721 = vmax.f32 %v1689, 0.0
    %v1722 = vmax.f32 %v1692, 0.0
    %v1723 = vmax.f32 %v1697, 0.0
    %v1724 = vmax.f32 %v1700, 0.0
    %v1725 = vmax.f32 %v1705, 0.0
    %v1726 = vmax.f32 %v1708, 0.0
    %v1727 = vpack.c.bf16 %v1712, %v1711
    %v1728 = vpack.c.bf16 %v1714, %v1713
    %v1729 = vpack.c.bf16 %v1716, %v1715
    %v1730 = vpack.c.bf16 %v1718, %v1717
    %v1731 = vpack.c.bf16 %v1720, %v1719
    %v1732 = vpack.c.bf16 %v1722, %v1721
    %v1733 = vpack.c.bf16 %v1724, %v1723
    %v1734 = vpack.c.bf16 %v1726, %v1725
    %v1735 = vld [vmem:[%s6] sm:$0x3]
    %v1736 = vld [vmem:[%s7] sm:$0x1]
    %v1738 = vlaneseq
    %v1739 = vshrl.u32 %v1738, 7
    %v1740 = vsub.s32 0, %v1739
    %v1741 = vrot.slane %v1736, %v1740
    %v1744 = vsel %vm269, %v1727, 0
    %v1747 = vsel %vm269, %v1728, 0
    %v1750 = vsel %vm269, %v1729, 0
    %v1753 = vsel %vm269, %v1730, 0
    %v1756 = vsel %vm269, %v1731, 0
    %v1759 = vsel %vm269, %v1732, 0
    %v1762 = vsel %vm269, %v1733, 0
    %v1765 = vsel %vm269, %v1734, 0
    %v1768 = vsel %vm366, %v1735, 0
    %1770 = vmatprep.subr.bf16.mxu0 0
    %1771 = vmatpush1.bf16.msra.mxu0 %v1768
    %1772 = vmatprep.subr.bf16.mxu0 0
    %1773 = vmatpush1.bf16.msra.mxu0 0
    %1774 = vmatprep.subr.bf16.mxu0 0
    %1775 = vmatpush1.bf16.msra.mxu0 0
    %1776 = vmatprep.subr.bf16.mxu0 0
    %1777 = vmatpush1.bf16.msra.mxu0 0
    %1778 = vmatprep.subr.bf16.mxu0 0
    %1779 = vmatpush1.bf16.msra.mxu0 0
    %1780 = vmatprep.subr.bf16.mxu0 0
    %1781 = vmatpush1.bf16.msra.mxu0 0
    %1782 = vmatprep.subr.bf16.mxu0 0
    %1783 = vmatpush1.bf16.msra.mxu0 0
    %1784 = vmatprep.subr.bf16.mxu0 0
    %1785 = vmatpush1.bf16.msra.mxu0 0
    %1786 = vmatprep.subr.bf16.mxu0 0
    %1787 = vmatpush1.bf16.msra.mxu0 0
    %1788 = vmatprep.subr.bf16.mxu0 0
    %1789 = vmatpush1.bf16.msra.mxu0 0
    %1790 = vmatprep.subr.bf16.mxu0 0
    %1791 = vmatpush1.bf16.msra.mxu0 0
    %1792 = vmatprep.subr.bf16.mxu0 0
    %1793 = vmatpush1.bf16.msra.mxu0 0
    %1794 = vmatprep.subr.bf16.mxu0 0
    %1795 = vmatpush1.bf16.msra.mxu0 0
    %1796 = vmatprep.subr.bf16.mxu0 0
    %1797 = vmatpush1.bf16.msra.mxu0 0
    %1798 = vmatprep.subr.bf16.mxu0 0
    %1799 = vmatpush1.bf16.msra.mxu0 0
    %1800 = vmatprep.subr.bf16.mxu0 0
    %1801 = vmatpush1.bf16.msra.mxu0 0
    %1802 = vmatprep.mubr.bf16.mxu0 0
    %1803 = vmatmul.mubr.bf16.gmra.mrb[0].mxu0 %v1744
    %v1804 = vpop.f32.mrb[0].mxu0
    %v1805 = vadd.f32 %v1741, %v1804
    %v1806 = vpop.f32.mrb[0].mxu0
    %v1807 = vpop.f32.mrb[0].mxu0
    %v1808 = vadd.f32 %v1741, %v1807
    %v1809 = vpop.f32.mrb[0].mxu0
    %1810 = vmatprep.mubr.bf16.mxu0 0
    %1811 = vmatmul.mubr.bf16.gmra.mrb[0].mxu0 %v1747
    %v1812 = vpop.f32.mrb[0].mxu0
    %v1813 = vadd.f32 %v1741, %v1812
    %v1814 = vpop.f32.mrb[0].mxu0
    %v1815 = vpop.f32.mrb[0].mxu0
    %v1816 = vadd.f32 %v1741, %v1815
    %v1817 = vpop.f32.mrb[0].mxu0
    %1818 = vmatprep.mubr.bf16.mxu0 0
    %1819 = vmatmul.mubr.bf16.gmra.mrb[0].mxu0 %v1750
    %v1820 = vpop.f32.mrb[0].mxu0
    %v1821 = vadd.f32 %v1741, %v1820
    %v1822 = vpop.f32.mrb[0].mxu0
    %v1823 = vpop.f32.mrb[0].mxu0
    %v1824 = vadd.f32 %v1741, %v1823
    %v1825 = vpop.f32.mrb[0].mxu0
    %1826 = vmatprep.mubr.bf16.mxu0 0
    %1827 = vmatmul.mubr.bf16.gmra.mrb[0].mxu0 %v1753
    %v1828 = vpop.f32.mrb[0].mxu0
    %v1829 = vadd.f32 %v1741, %v1828
    %v1830 = vpop.f32.mrb[0].mxu0
    %v1831 = vpop.f32.mrb[0].mxu0
    %v1832 = vadd.f32 %v1741, %v1831
    %v1833 = vpop.f32.mrb[0].mxu0
    %1834 = vmatprep.mubr.bf16.mxu0 0
    %1835 = vmatmul.mubr.bf16.gmra.mrb[0].mxu0 %v1756
    %v1836 = vpop.f32.mrb[0].mxu0
    %v1837 = vadd.f32 %v1741, %v1836
    %v1838 = vpop.f32.mrb[0].mxu0
    %v1839 = vpop.f32.mrb[0].mxu0
    %v1840 = vadd.f32 %v1741, %v1839
    %v1841 = vpop.f32.mrb[0].mxu0
    %1842 = vmatprep.mubr.bf16.mxu0 0
    %1843 = vmatmul.mubr.bf16.gmra.mrb[0].mxu0 %v1759
    %v1844 = vpop.f32.mrb[0].mxu0
    %v1845 = vadd.f32 %v1741, %v1844
    %v1846 = vpop.f32.mrb[0].mxu0
    %v1847 = vpop.f32.mrb[0].mxu0
    %v1848 = vadd.f32 %v1741, %v1847
    %v1849 = vpop.f32.mrb[0].mxu0
    %1850 = vmatprep.mubr.bf16.mxu0 0
    %1851 = vmatmul.mubr.bf16.gmra.mrb[0].mxu0 %v1762
    %v1852 = vpop.f32.mrb[0].mxu0
    %v1853 = vadd.f32 %v1741, %v1852
    %v1854 = vpop.f32.mrb[0].mxu0
    %v1855 = vpop.f32.mrb[0].mxu0
    %v1856 = vadd.f32 %v1741, %v1855
    %v1857 = vpop.f32.mrb[0].mxu0
    %1858 = vmatprep.mubr.bf16.mxu0 0
    %1859 = vmatmul.mubr.bf16.gmra.mrb[0].mxu0 %v1765
    %v1860 = vpop.f32.mrb[0].mxu0
    %v1861 = vadd.f32 %v1741, %v1860
    %v1862 = vpop.f32.mrb[0].mxu0
    %v1863 = vpop.f32.mrb[0].mxu0
    %v1864 = vadd.f32 %v1741, %v1863
    %v1865 = vpop.f32.mrb[0].mxu0
    %1866 = vdwg.mxu0
    %v1867 = vld [vmem:[%s1] sm:$0xf]
    %v1868 = vld [vmem:[%s1 + $0x4] sm:$0xf]
    %v1869 = vld [vmem:[%s1 + $0x8] sm:$0xf]
    %v1870 = vld [vmem:[%s1 + $0xc] sm:$0xf]
    %v1871 = vld [vmem:[%s1 + $0x10] sm:$0xf]
    %v1872 = vld [vmem:[%s1 + $0x14] sm:$0xf]
    %v1873 = vld [vmem:[%s1 + $0x18] sm:$0xf]
    %v1874 = vld [vmem:[%s1 + $0x1c] sm:$0xf]
    %v1875 = vld [vmem:[%s1 + $0x20] sm:$0xf]
    %v1876 = vld [vmem:[%s1 + $0x24] sm:$0xf]
    %v1877 = vld [vmem:[%s1 + $0x28] sm:$0xf]
    %v1878 = vld [vmem:[%s1 + $0x2c] sm:$0xf]
    %v1879 = vld [vmem:[%s1 + $0x30] sm:$0xf]
    %v1880 = vld [vmem:[%s1 + $0x34] sm:$0xf]
    %v1881 = vld [vmem:[%s1 + $0x38] sm:$0xf]
    %v1882 = vld [vmem:[%s1 + $0x3c] sm:$0xf]
    %v1883 = vld [vmem:[%s8] sm:$0x3]
    %v1884 = vld [vmem:[%s9] sm:$0x1]
    %v1886 = vlaneseq
    %v1887 = vshrl.u32 %v1886, 7
    %v1888 = vsub.s32 0, %v1887
    %v1889 = vrot.slane %v1884, %v1888
    %v1907 = vunpack.c.l.b16 %v1867
    %v1908 = vunpack.c.l.b16 %v1868
    %v1909 = vunpack.c.l.b16 %v1869
    %v1910 = vunpack.c.l.b16 %v1870
    %v1911 = vunpack.c.l.b16 %v1871
    %v1912 = vunpack.c.l.b16 %v1872
    %v1913 = vunpack.c.l.b16 %v1873
    %v1914 = vunpack.c.l.b16 %v1874
    %v1915 = vunpack.c.l.b16 %v1875
    %v1916 = vunpack.c.l.b16 %v1876
    %v1917 = vunpack.c.l.b16 %v1877
    %v1918 = vunpack.c.l.b16 %v1878
    %v1919 = vunpack.c.l.b16 %v1879
    %v1920 = vunpack.c.l.b16 %v1880
    %v1921 = vunpack.c.l.b16 %v1881
    %v1922 = vunpack.c.l.b16 %v1882
    %v1923 = vpack.c.b16 %v1908, %v1907
    %v1924 = vpack.c.b16 %v1910, %v1909
    %v1925 = vpack.c.b16 %v1912, %v1911
    %v1926 = vpack.c.b16 %v1914, %v1913
    %v1927 = vpack.c.b16 %v1916, %v1915
    %v1928 = vpack.c.b16 %v1918, %v1917
    %v1929 = vpack.c.b16 %v1920, %v1919
    %v1930 = vpack.c.b16 %v1922, %v1921
    %v1932 = vsel %vm269, %v1923, 0
    %v1935 = vsel %vm269, %v1924, 0
    %v1938 = vsel %vm269, %v1925, 0
    %v1941 = vsel %vm269, %v1926, 0
    %v1944 = vsel %vm269, %v1927, 0
    %v1947 = vsel %vm269, %v1928, 0
    %v1950 = vsel %vm269, %v1929, 0
    %v1953 = vsel %vm269, %v1930, 0
    %v1956 = vsel %vm366, %v1883, 0
    %1958 = vmatprep.subr.bf16.mxu0 0
    %1959 = vmatpush1.bf16.msra.mxu0 %v1956
    %1960 = vmatprep.subr.bf16.mxu0 0
    %1961 = vmatpush1.bf16.msra.mxu0 0
    %1962 = vmatprep.subr.bf16.mxu0 0
    %1963 = vmatpush1.bf16.msra.mxu0 0
    %1964 = vmatprep.subr.bf16.mxu0 0
    %1965 = vmatpush1.bf16.msra.mxu0 0
    %1966 = vmatprep.subr.bf16.mxu0 0
    %1967 = vmatpush1.bf16.msra.mxu0 0
    %1968 = vmatprep.subr.bf16.mxu0 0
    %1969 = vmatpush1.bf16.msra.mxu0 0
    %1970 = vmatprep.subr.bf16.mxu0 0
    %1971 = vmatpush1.bf16.msra.mxu0 0
    %1972 = vmatprep.subr.bf16.mxu0 0
    %1973 = vmatpush1.bf16.msra.mxu0 0
    %1974 = vmatprep.subr.bf16.mxu0 0
    %1975 = vmatpush1.bf16.msra.mxu0 0
    %1976 = vmatprep.subr.bf16.mxu0 0
    %1977 = vmatpush1.bf16.msra.mxu0 0
    %1978 = vmatprep.subr.bf16.mxu0 0
    %1979 = vmatpush1.bf16.msra.mxu0 0
    %1980 = vmatprep.subr.bf16.mxu0 0
    %1981 = vmatpush1.bf16.msra.mxu0 0
    %1982 = vmatprep.subr.bf16.mxu0 0
    %1983 = vmatpush1.bf16.msra.mxu0 0
    %1984 = vmatprep.subr.bf16.mxu0 0
    %1985 = vmatpush1.bf16.msra.mxu0 0
    %1986 = vmatprep.subr.bf16.mxu0 0
    %1987 = vmatpush1.bf16.msra.mxu0 0
    %1988 = vmatprep.subr.bf16.mxu0 0
    %1989 = vmatpush1.bf16.msra.mxu0 0
    %1990 = vmatprep.mubr.bf16.mxu0 0
    %1991 = vmatmul.mubr.bf16.gmra.mrb[0].mxu0 %v1932
    %v1992 = vpop.f32.mrb[0].mxu0
    %v1993 = vadd.f32 %v1889, %v1992
    %v1994 = vpop.f32.mrb[0].mxu0
    %v1995 = vpop.f32.mrb[0].mxu0
    %v1996 = vadd.f32 %v1889, %v1995
    %v1997 = vpop.f32.mrb[0].mxu0
    %1998 = vmatprep.mubr.bf16.mxu0 0
    %1999 = vmatmul.mubr.bf16.gmra.mrb[0].mxu0 %v1935
    %v2000 = vpop.f32.mrb[0].mxu0
    %v2001 = vadd.f32 %v1889, %v2000
    %v2002 = vpop.f32.mrb[0].mxu0
    %v2003 = vpop.f32.mrb[0].mxu0
    %v2004 = vadd.f32 %v1889, %v2003
    %v2005 = vpop.f32.mrb[0].mxu0
    %2006 = vmatprep.mubr.bf16.mxu0 0
    %2007 = vmatmul.mubr.bf16.gmra.mrb[0].mxu0 %v1938
    %v2008 = vpop.f32.mrb[0].mxu0
    %v2009 = vadd.f32 %v1889, %v2008
    %v2010 = vpop.f32.mrb[0].mxu0
    %v2011 = vpop.f32.mrb[0].mxu0
    %v2012 = vadd.f32 %v1889, %v2011
    %v2013 = vpop.f32.mrb[0].mxu0
    %2014 = vmatprep.mubr.bf16.mxu0 0
    %2015 = vmatmul.mubr.bf16.gmra.mrb[0].mxu0 %v1941
    %v2016 = vpop.f32.mrb[0].mxu0
    %v2017 = vadd.f32 %v1889, %v2016
    %v2018 = vpop.f32.mrb[0].mxu0
    %v2019 = vpop.f32.mrb[0].mxu0
    %v2020 = vadd.f32 %v1889, %v2019
    %v2021 = vpop.f32.mrb[0].mxu0
    %2022 = vmatprep.mubr.bf16.mxu0 0
    %2023 = vmatmul.mubr.bf16.gmra.mrb[0].mxu0 %v1944
    %v2024 = vpop.f32.mrb[0].mxu0
    %v2025 = vadd.f32 %v1889, %v2024
    %v2026 = vpop.f32.mrb[0].mxu0
    %v2027 = vpop.f32.mrb[0].mxu0
    %v2028 = vadd.f32 %v1889, %v2027
    %v2029 = vpop.f32.mrb[0].mxu0
    %2030 = vmatprep.mubr.bf16.mxu0 0
    %2031 = vmatmul.mubr.bf16.gmra.mrb[0].mxu0 %v1947
    %v2032 = vpop.f32.mrb[0].mxu0
    %v2033 = vadd.f32 %v1889, %v2032
    %v2034 = vpop.f32.mrb[0].mxu0
    %v2035 = vpop.f32.mrb[0].mxu0
    %v2036 = vadd.f32 %v1889, %v2035
    %v2037 = vpop.f32.mrb[0].mxu0
    %2038 = vmatprep.mubr.bf16.mxu0 0
    %2039 = vmatmul.mubr.bf16.gmra.mrb[0].mxu0 %v1950
    %v2040 = vpop.f32.mrb[0].mxu0
    %v2041 = vadd.f32 %v1889, %v2040
    %v2042 = vpop.f32.mrb[0].mxu0
    %v2043 = vpop.f32.mrb[0].mxu0
    %v2044 = vadd.f32 %v1889, %v2043
    %v2045 = vpop.f32.mrb[0].mxu0
    %2046 = vmatprep.mubr.bf16.mxu0 0
    %2047 = vmatmul.mubr.bf16.gmra.mrb[0].mxu0 %v1953
    %v2048 = vpop.f32.mrb[0].mxu0
    %v2049 = vadd.f32 %v1889, %v2048
    %v2050 = vpop.f32.mrb[0].mxu0
    %v2051 = vpop.f32.mrb[0].mxu0
    %v2052 = vadd.f32 %v1889, %v2051
    %v2053 = vpop.f32.mrb[0].mxu0
    %2054 = vdwg.mxu0
    %v2055 = vadd.f32 %v1805, %v1993
    %v2056 = vadd.f32 %v1808, %v1996
    %v2057 = vadd.f32 %v1813, %v2001
    %v2058 = vadd.f32 %v1816, %v2004
    %v2059 = vadd.f32 %v1821, %v2009
    %v2060 = vadd.f32 %v1824, %v2012
    %v2061 = vadd.f32 %v1829, %v2017
    %v2062 = vadd.f32 %v1832, %v2020
    %v2063 = vadd.f32 %v1837, %v2025
    %v2064 = vadd.f32 %v1840, %v2028
    %v2065 = vadd.f32 %v1845, %v2033
    %v2066 = vadd.f32 %v1848, %v2036
    %v2067 = vadd.f32 %v1853, %v2041
    %v2068 = vadd.f32 %v1856, %v2044
    %v2069 = vadd.f32 %v1861, %v2049
    %v2070 = vadd.f32 %v1864, %v2052
    %v2071 = vmax.f32 %v2055, 0.0
    %v2072 = vmax.f32 %v2056, 0.0
    %v2073 = vmax.f32 %v2057, 0.0
    %v2074 = vmax.f32 %v2058, 0.0
    %v2075 = vmax.f32 %v2059, 0.0
    %v2076 = vmax.f32 %v2060, 0.0
    %v2077 = vmax.f32 %v2061, 0.0
    %v2078 = vmax.f32 %v2062, 0.0
    %v2079 = vmax.f32 %v2063, 0.0
    %v2080 = vmax.f32 %v2064, 0.0
    %v2081 = vmax.f32 %v2065, 0.0
    %v2082 = vmax.f32 %v2066, 0.0
    %v2083 = vmax.f32 %v2067, 0.0
    %v2084 = vmax.f32 %v2068, 0.0
    %v2085 = vmax.f32 %v2069, 0.0
    %v2086 = vmax.f32 %v2070, 0.0
    %v2087 = vpack.c.bf16 %v2072, %v2071
    %v2088 = vpack.c.bf16 %v2074, %v2073
    %v2089 = vpack.c.bf16 %v2076, %v2075
    %v2090 = vpack.c.bf16 %v2078, %v2077
    %v2091 = vpack.c.bf16 %v2080, %v2079
    %v2092 = vpack.c.bf16 %v2082, %v2081
    %v2093 = vpack.c.bf16 %v2084, %v2083
    %v2094 = vpack.c.bf16 %v2086, %v2085
    %v2103 = vunpack.c.l.b16 %v2087
    %v2104 = vunpack.c.h.b16 %v2087
    %v2105 = vunpack.c.l.b16 %v2088
    %v2106 = vunpack.c.h.b16 %v2088
    %v2107 = vunpack.c.l.b16 %v2089
    %v2108 = vunpack.c.h.b16 %v2089
    %v2109 = vunpack.c.l.b16 %v2090
    %v2110 = vunpack.c.h.b16 %v2090
    %v2111 = vunpack.c.l.b16 %v2091
    %v2112 = vunpack.c.h.b16 %v2091
    %v2113 = vunpack.c.l.b16 %v2092
    %v2114 = vunpack.c.h.b16 %v2092
    %v2115 = vunpack.c.l.b16 %v2093
    %v2116 = vunpack.c.h.b16 %v2093
    %v2117 = vunpack.c.l.b16 %v2094
    %v2118 = vunpack.c.h.b16 %v2094
    %v2119 = vpack.c.b16 %v2103, %v2103
    %v2120 = vpack.c.b16 %v2104, %v2104
    %v2121 = vpack.c.b16 %v2105, %v2105
    %v2122 = vpack.c.b16 %v2106, %v2106
    %v2123 = vpack.c.b16 %v2107, %v2107
    %v2124 = vpack.c.b16 %v2108, %v2108
    %v2125 = vpack.c.b16 %v2109, %v2109
    %v2126 = vpack.c.b16 %v2110, %v2110
    %v2127 = vpack.c.b16 %v2111, %v2111
    %v2128 = vpack.c.b16 %v2112, %v2112
    %v2129 = vpack.c.b16 %v2113, %v2113
    %v2130 = vpack.c.b16 %v2114, %v2114
    %v2131 = vpack.c.b16 %v2115, %v2115
    %v2132 = vpack.c.b16 %v2116, %v2116
    %v2133 = vpack.c.b16 %v2117, %v2117
    %v2134 = vpack.c.b16 %v2118, %v2118
    %vm2151 = vcmask 125952
    %2152 = vst.msk [vmem:[#allocation3] sm:$0xf] %vm2151, %v2119
    %2153 = vst.msk [vmem:[#allocation3 + $0x4] sm:$0xf] %vm2151, %v2120
    %2154 = vst.msk [vmem:[#allocation3 + $0x8] sm:$0xf] %vm2151, %v2121
    %2155 = vst.msk [vmem:[#allocation3 + $0xc] sm:$0xf] %vm2151, %v2122
    %2156 = vst.msk [vmem:[#allocation3 + $0x10] sm:$0xf] %vm2151, %v2123
    %2157 = vst.msk [vmem:[#allocation3 + $0x14] sm:$0xf] %vm2151, %v2124
    %2158 = vst.msk [vmem:[#allocation3 + $0x18] sm:$0xf] %vm2151, %v2125
    %2159 = vst.msk [vmem:[#allocation3 + $0x1c] sm:$0xf] %vm2151, %v2126
    %2160 = vst.msk [vmem:[#allocation3 + $0x20] sm:$0xf] %vm2151, %v2127
    %2161 = vst.msk [vmem:[#allocation3 + $0x24] sm:$0xf] %vm2151, %v2128
    %2162 = vst.msk [vmem:[#allocation3 + $0x28] sm:$0xf] %vm2151, %v2129
    %2163 = vst.msk [vmem:[#allocation3 + $0x2c] sm:$0xf] %vm2151, %v2130
    %2164 = vst.msk [vmem:[#allocation3 + $0x30] sm:$0xf] %vm2151, %v2131
    %2165 = vst.msk [vmem:[#allocation3 + $0x34] sm:$0xf] %vm2151, %v2132
    %2166 = vst.msk [vmem:[#allocation3 + $0x38] sm:$0xf] %vm2151, %v2133
    %2167 = vst.msk [vmem:[#allocation3 + $0x3c] sm:$0xf] %vm2151, %v2134
    // Predicated region
    $region42: #{bottleneck_forward_nhwc.1} parent=1 // pred_check
      _
    $region43: #{bottleneck_forward_nhwc.1} parent=1 // pred_check_branch
      %2169 = sbr.rel (0) target = $region45
    $region44: #{bottleneck_forward_nhwc.1} parent=1 // pred_region
      %s2171 = ssub.s32 1024, 1024
      %2172 = vsyncadd [#allocation4], %s2171
      %s2173 = sshll.u32 [#allocation3], 4
      %s2174 = int_to_ptr.vmem [resolvable:$true] %s2173
      %2179 = dma.vmem_to_hbm [thread:$0]  %s2174, 1024, %s10, [#allocation4], 64, 64, 4
    $region45: #{bottleneck_forward_nhwc.1} parent=1 // pred_fallthru
      _
    // Predicated region
    $region46: #{bottleneck_forward_nhwc.1} parent=1 // pred_check
      _
    $region47: #{bottleneck_forward_nhwc.1} parent=1 // pred_check_branch
      %2181 = sbr.rel (0) target = $region49
    $region48: #{bottleneck_forward_nhwc.1} parent=1 // pred_region
      %2182 = dma.done [#allocation4], 1024
    $region49: #{bottleneck_forward_nhwc.1} parent=1 // pred_fallthru
      _
    %2183 = vsyncpa [#allocation4], 1

</llo_original>
